<compile_context>
chip_gen: v6e
topology: v6e:2x2x1
jax: 0.10.0
libtpu: 0.0.40
codegen_flags: <defaults>
</compile_context>

<pallas_src>
import jax
import jax.numpy as jnp
from jax.experimental import pallas as pl
from jax.experimental.pallas import tpu as pltpu


# ---------------------------------------------------------------------------
# Static architecture / fused-layout description (matches the PyTorch module)
# ---------------------------------------------------------------------------
_CHANS = ((256, 128), (128, 64), (64, 32), (32, 16), (16, 3))
# Per layer: how many 128-wide output-column groups are moved to ROWS ("split").
# Column groups that stay put are handled by block-diagonal ("folded") weights
# in the NEXT layer.  This plan keeps every activation width a multiple of 128
# (128, 128, 256, 512) and the kernel output 384 = 3*128 wide (lane-dense).
_SPLIT = (4, 2, 1, 1, 1)


def _build_layout():
    layout, folds = [], []
    fold, row = 1, 0
    for (cin, cout), split in zip(_CHANS, _SPLIT):
        cin_eff = fold * cin                 # block-diag folded input width
        ncols = fold * 4 * cout              # block-diag folded output width
        assert ncols % split == 0 and (ncols // split) % 128 == 0, (
            "fused layout must keep activations lane-dense")
        folds.append(fold)
        layout.append((row, cin_eff, ncols, split))
        row += cin_eff
        fold = fold * 4 // split
    return tuple(layout), tuple(folds), row


_LAYOUT, _FOLDS, _SLAB_ROWS = _build_layout()          # offsets: 0,256,384,512,768
_SLAB_W = max(nc for (_, _, nc, _) in _LAYOUT)         # 512
_ROW_UPSAMPLE = 1
for _s in _SPLIT:
    _ROW_UPSAMPLE *= _s                                # 8 output rows per input row
_OUT_WIDTH = _LAYOUT[-1][2]                            # 384 = 3 * 128


# ---------------------------------------------------------------------------
# Fused kernel
# ---------------------------------------------------------------------------
def _fused_decoder_kernel(x_ref, wslab_ref, bslab_ref, o_ref, *act_refs):
    """One grid step = one batch block.

    x_ref     : (r0, 256) f32, rows ordered (b, h0, w0)
    wslab_ref : (1280, 512) bf16 weight slab; layer l lives at
                rows [row0, row0+cin_eff), cols [0, ncols) (block-diag folded,
                columns ordered (groups..., kh, kw, co))
    bslab_ref : (8, 512) f32 bias slab, row l = folded bias of layer l
    o_ref     : (8*r0, 384) f32, lane-dense output in static "tree order"
    act_refs  : bf16 VMEM scratch for the 4 intermediate activations

    Row bookkeeping (undone by one static host-side permute):
      layer 1 moves all 4 (kh1,kw1) column groups to rows -> rows (q1, b, m0)
      layer 2 moves the 2 kh2 groups to rows            -> rows (kh2, q1, b, m0)
      layers 3-5 keep (kw2, kh3, kw3, kh4, kw4, kh5, kw5, c) in columns.
    All column slices are multiples of 128 -> full-vreg, unmasked stores.
    """
    act = x_ref[...].astype(jnp.bfloat16)                        # (r0, 256)
    n_layers = len(_LAYOUT)
    for l, (row0, cin_eff, ncols, split) in enumerate(_LAYOUT):
        w = wslab_ref[row0:row0 + cin_eff, 0:ncols]              # bf16, aligned
        bias = bslab_ref[l:l + 1, 0:ncols]                       # (1, ncols) f32
        y = jnp.dot(act, w, preferred_element_type=jnp.float32)  # MXU
        y = jnp.maximum(y + bias, 0.0)                           # f32 bias+ReLU
        if l == n_layers - 1:
            o_ref[...] = y.astype(o_ref.dtype)                   # lane-dense store
        else:
            a_ref = act_refs[l]                                  # bf16 scratch
            m = y.shape[0]
            gw = ncols // split                                  # multiple of 128
            for g in range(split):                               # static unroll
                a_ref[g * m:(g + 1) * m, :] = (
                    y[:, g * gw:(g + 1) * gw].astype(a_ref.dtype))
            act = a_ref[...]


# ---------------------------------------------------------------------------
# Host-side one-time weight packing
# ---------------------------------------------------------------------------
def prepare_params(params):
    """Pack the 5 (weight, bias) pairs into two slabs (done once, outside jit).

    PyTorch ConvTranspose2d weight (Cin, Cout, 2, 2) -> (Cin, 4*Cout) with
    columns ordered (kh, kw, co); then block-diagonal fold by `fold` groups
    (kron(I_fold, W)) so later narrow layers stay lane-dense; concatenated
    (column-padded to 512) into one bf16 weight slab + one f32 bias slab.
    """
    assert len(params) == len(_CHANS)
    w_blocks, b_rows = [], []
    for (w, b), (cin, cout), fold in zip(params, _CHANS, _FOLDS):
        assert w.shape == (cin, cout, 2, 2) and b.shape == (cout,)
        wp = jnp.transpose(w, (0, 2, 3, 1)).reshape(cin, 4 * cout)  # (kh,kw,co)
        bp = jnp.tile(b, 4)                                          # (4*cout,)
        w_eff = jnp.kron(jnp.eye(fold, dtype=wp.dtype), wp)          # block-diag
        b_eff = jnp.tile(bp, fold)
        w_blocks.append(jnp.pad(w_eff, ((0, 0), (0, _SLAB_W - w_eff.shape[1]))))
        b_rows.append(jnp.pad(b_eff, (0, _SLAB_W - b_eff.shape[0])))
    wslab = jnp.concatenate(w_blocks, axis=0).astype(jnp.bfloat16)   # (1280, 512)
    bslab = jnp.stack(b_rows).astype(jnp.float32)                    # (5, 512)
    bslab = jnp.pad(bslab, ((0, 8 - bslab.shape[0]), (0, 0)))        # (8, 512)
    return wslab, bslab


def _pick_batch_block(batch, m0, row_cap=128):
    """Largest bb | batch with bb*m0 <= row_cap rows per grid step.

    bb*m0 must be a multiple of 8 (sublane-aligned row blocks) unless bb==batch
    (block == full array is always legal).  row_cap=128 already fills v5e's
    4x128 MXU; raise toward 256-512 for v6e/v7x when batch*m0 allows, keeping
    an even number of grid steps for v7x's two TensorCores.
    """
    cands = [d for d in range(1, batch + 1)
             if batch % d == 0 and (d == batch or (d * m0) % 8 == 0)]
    fitting = [d for d in cands if d * m0 <= row_cap]
    return max(fitting) if fitting else min(cands)


# ---------------------------------------------------------------------------
# Forward
# ---------------------------------------------------------------------------
@jax.jit
def conv_decoder_forward(x_nchw, wslab, bslab):
    """Full ConvDecoder forward. Input/output NCHW f32 to match PyTorch."""
    B, C0, H0, W0 = x_nchw.shape
    assert C0 == _CHANS[0][0]
    assert wslab.shape == (_SLAB_ROWS, _SLAB_W)
    L = len(_CHANS)
    c_out = _CHANS[-1][1]
    M0 = H0 * W0
    bb = _pick_batch_block(B, M0)          # images per grid step (batch block)
    nb = B // bb
    r0 = bb * M0                           # layer-1 matmul rows per step
    out_rows_blk = r0 * _ROW_UPSAMPLE      # 8 * r0

    # NCHW -> (B*M0, C0), rows in (b, h0, w0) raster order.
    x2d = jnp.transpose(x_nchw, (0, 2, 3, 1)).reshape(B * M0, C0)

    # bf16 scratch for the 4 intermediate activations (all widths % 128 == 0).
    scratch_shapes = []
    r = r0
    for (_, _, ncols, split) in _LAYOUT[:-1]:
        r *= split
        scratch_shapes.append(pltpu.VMEM((r, ncols // split), jnp.bfloat16))

    out2d = pl.pallas_call(
        _fused_decoder_kernel,
        out_shape=jax.ShapeDtypeStruct((nb * out_rows_blk, _OUT_WIDTH),
                                       jnp.float32),
        grid=(nb,),
        in_specs=[
            pl.BlockSpec((r0, C0), lambda i: (i, 0)),
            pl.BlockSpec(wslab.shape, lambda i: (0, 0)),   # weight slab, 1 window
            pl.BlockSpec(bslab.shape, lambda i: (0, 0)),   # bias slab, 1 window
        ],
        out_specs=pl.BlockSpec((out_rows_blk, _OUT_WIDTH), lambda i: (i, 0)),
        scratch_shapes=scratch_shapes,
        compiler_params=pltpu.CompilerParams(
            dimension_semantics=("parallel",),
            vmem_limit_bytes=32 * 1024 * 1024),
    )(x2d, wslab, bslab)

    # Undo the static "tree order" (tied to _SPLIT = (4, 2, 1, 1, 1)):
    #   rows    = (block_i, kh2, kh1, kw1, b_in, h0, w0)
    #   columns = (kw2, kh3, kw3, kh4, kw4, kh5, kw5, c)
    # -> NCHW with H = 32*h0 +16*kh1 +8*kh2 +4*kh3 +2*kh4 +kh5 (same for W).
    t = out2d.reshape(nb, 2, 2, 2, bb, H0, W0, 2, 2, 2, 2, 2, 2, 2, c_out)
    t = jnp.transpose(t, (0, 4, 14, 5, 2, 1, 8, 10, 12, 6, 3, 7, 9, 11, 13))
    return t.reshape(B, c_out, H0 * 2 ** L, W0 * 2 ** L)


# ---------------------------------------------------------------------------
# Parameters + pure-JAX reference (auditable, f32, NCHW)
# ---------------------------------------------------------------------------
def make_params(key):
    """Deterministic synthetic weights. PyTorch ConvTranspose2d weight shape:
    (in_channels, out_channels, kH, kW); bias shape (out_channels,)."""
    params = []
    for (cin, cout) in _CHANS:
        key, kw_, kb_ = jax.random.split(key, 3)
        scale = 1.0 / jnp.sqrt(cin * 4.0)
        w = jax.random.normal(kw_, (cin, cout, 2, 2), jnp.float32) * scale
        b = jax.random.normal(kb_, (cout,), jnp.float32) * 0.01
        params.append((w, b))
    return params


def conv_decoder_reference(x_nchw, params):
    """Pure-JAX f32 reference with exact ConvTranspose2d(k=2, s=2) semantics:
    out[b, o, 2h+kh, 2w+kw] = sum_c x[b, c, h, w] * W[c, o, kh, kw] + bias[o]."""
    x = x_nchw
    for w, b in params:
        B, _, H, W = x.shape
        cout = w.shape[1]
        y = jnp.einsum("bchw,cokl->bohkwl", x, w)      # (B, O, H, 2, W, 2)
        y = y.reshape(B, cout, 2 * H, 2 * W) + b[None, :, None, None]
        x = jnp.maximum(y, 0.0)
    return x


# ---------------------------------------------------------------------------
if __name__ == "__main__":
    key = jax.random.PRNGKey(0)
    key, kx = jax.random.split(key)

    # Small example consistent with the module: 256 input channels, 2x2 spatial.
    B, C, Hin, Win = 2, 256, 2, 2
    x = jax.random.normal(kx, (B, C, Hin, Win), jnp.float32)

    params = make_params(key)
    wslab, bslab = prepare_params(params)     # one-time bf16 slab packing

    out = jax.block_until_ready(conv_decoder_forward(x, wslab, bslab))
    assert out.shape == (B, 3, Hin * 32, Win * 32), out.shape

    ref = jax.block_until_ready(conv_decoder_reference(x, params))
    # bf16 matmul inputs (f32 accumulate) -> loosened tolerance vs f32 reference.
    err = float(jnp.max(jnp.abs(out - ref)))
    assert jnp.allclose(out, ref, atol=2e-2, rtol=2e-2), (
        f"mismatch vs reference, max abs err = {err}")

    print("KERNEL_OK")
</pallas_src>

<mosaic_0001>
module attributes {stable_mosaic.version = 11 : i64} {
  func.func @_fused_decoder_kernel(%arg0: i32, %arg1: memref<8x256xf32, #tpu.memory_space<vmem>>, %arg2: memref<1280x512xbf16, #tpu.memory_space<vmem>>, %arg3: memref<8x512xf32, #tpu.memory_space<vmem>>, %arg4: memref<64x384xf32, #tpu.memory_space<vmem>>, %arg5: memref<32x128xbf16, #tpu.memory_space<vmem>>, %arg6: memref<64x128xbf16, #tpu.memory_space<vmem>>, %arg7: memref<64x256xbf16, #tpu.memory_space<vmem>>, %arg8: memref<64x512xbf16, #tpu.memory_space<vmem>>) attributes {dimension_semantics = [#tpu.dimension_semantics<parallel>], iteration_bounds = array<i64: 1>, scalar_prefetch = 0 : i64, scratch_operands = 4 : i64, tpu.core_type = #tpu.core_type<tc>, window_params = [{transform_indices = @transform_0, window_bounds = array<i64: 8, 256>}, {pipeline_mode = #tpu.pipeline_mode<synchronous>, transform_indices = @transform_1, window_bounds = array<i64: 1280, 512>}, {pipeline_mode = #tpu.pipeline_mode<synchronous>, transform_indices = @transform_2, window_bounds = array<i64: 8, 512>}, {transform_indices = @transform_3, window_bounds = array<i64: 64, 384>}]} {
    %c0 = arith.constant 0 : index
    %c0_0 = arith.constant 0 : index
    %0 = vector.load %arg1[%c0, %c0_0] : memref<8x256xf32, #tpu.memory_space<vmem>>, vector<8x256xf32>
    %1 = arith.truncf %0 : vector<8x256xf32> to vector<8x256xbf16>
    %c0_1 = arith.constant 0 : index
    %c0_2 = arith.constant 0 : index
    %2 = vector.load %arg2[%c0_1, %c0_2] : memref<1280x512xbf16, #tpu.memory_space<vmem>>, vector<256x512xbf16>
    %c0_3 = arith.constant 0 : index
    %c0_4 = arith.constant 0 : index
    %3 = vector.load %arg3[%c0_3, %c0_4] : memref<8x512xf32, #tpu.memory_space<vmem>>, vector<1x512xf32>
    %cst = arith.constant dense<0.000000e+00> : vector<8x512xf32>
    %4 = tpu.matmul %1, %2, %cst {dimension_numbers = #tpu.dot_dimension_numbers<[1], [0], [0], [1], [0, 0, 1, 1], [], []>} : vector<8x256xbf16>, vector<256x512xbf16>, vector<8x512xf32> -> vector<8x512xf32>
    %5 = vector.broadcast %3 : vector<1x512xf32> to vector<8x512xf32>
    %6 = arith.addf %4, %5 : vector<8x512xf32>
    %cst_5 = arith.constant 0.000000e+00 : f32
    %7 = vector.broadcast %cst_5 : f32 to vector<8x512xf32>
    %8 = arith.maximumf %6, %7 : vector<8x512xf32>
    %9 = vector.extract_strided_slice %8 {offsets = [0, 0], sizes = [8, 128], strides = [1, 1]} : vector<8x512xf32> to vector<8x128xf32>
    %10 = arith.truncf %9 : vector<8x128xf32> to vector<8x128xbf16>
    %c0_6 = arith.constant 0 : index
    %c0_7 = arith.constant 0 : index
    %11 = vector.load %arg5[%c0_6, %c0_7] : memref<32x128xbf16, #tpu.memory_space<vmem>>, vector<8x128xbf16>
    tpu.vector_store %arg5[%c0_6, %c0_7], %10 {strides = array<i32>} : memref<32x128xbf16, #tpu.memory_space<vmem>>, vector<8x128xbf16>,
    %12 = vector.extract_strided_slice %8 {offsets = [0, 128], sizes = [8, 128], strides = [1, 1]} : vector<8x512xf32> to vector<8x128xf32>
    %13 = arith.truncf %12 : vector<8x128xf32> to vector<8x128xbf16>
    %c8 = arith.constant 8 : index
    %c0_8 = arith.constant 0 : index
    %14 = vector.load %arg5[%c8, %c0_8] : memref<32x128xbf16, #tpu.memory_space<vmem>>, vector<8x128xbf16>
    tpu.vector_store %arg5[%c8, %c0_8], %13 {strides = array<i32>} : memref<32x128xbf16, #tpu.memory_space<vmem>>, vector<8x128xbf16>,
    %15 = vector.extract_strided_slice %8 {offsets = [0, 256], sizes = [8, 128], strides = [1, 1]} : vector<8x512xf32> to vector<8x128xf32>
    %16 = arith.truncf %15 : vector<8x128xf32> to vector<8x128xbf16>
    %c16 = arith.constant 16 : index
    %c0_9 = arith.constant 0 : index
    %17 = vector.load %arg5[%c16, %c0_9] : memref<32x128xbf16, #tpu.memory_space<vmem>>, vector<8x128xbf16>
    tpu.vector_store %arg5[%c16, %c0_9], %16 {strides = array<i32>} : memref<32x128xbf16, #tpu.memory_space<vmem>>, vector<8x128xbf16>,
    %18 = vector.extract_strided_slice %8 {offsets = [0, 384], sizes = [8, 128], strides = [1, 1]} : vector<8x512xf32> to vector<8x128xf32>
    %19 = arith.truncf %18 : vector<8x128xf32> to vector<8x128xbf16>
    %c24 = arith.constant 24 : index
    %c0_10 = arith.constant 0 : index
    %20 = vector.load %arg5[%c24, %c0_10] : memref<32x128xbf16, #tpu.memory_space<vmem>>, vector<8x128xbf16>
    tpu.vector_store %arg5[%c24, %c0_10], %19 {strides = array<i32>} : memref<32x128xbf16, #tpu.memory_space<vmem>>, vector<8x128xbf16>,
    %c0_11 = arith.constant 0 : index
    %c0_12 = arith.constant 0 : index
    %21 = vector.load %arg5[%c0_11, %c0_12] : memref<32x128xbf16, #tpu.memory_space<vmem>>, vector<32x128xbf16>
    %c256 = arith.constant 256 : index
    %c0_13 = arith.constant 0 : index
    %22 = vector.load %arg2[%c256, %c0_13] : memref<1280x512xbf16, #tpu.memory_space<vmem>>, vector<128x256xbf16>
    %c1 = arith.constant 1 : index
    %c0_14 = arith.constant 0 : index
    %23 = vector.load %arg3[%c1, %c0_14] : memref<8x512xf32, #tpu.memory_space<vmem>>, vector<1x256xf32>
    %cst_15 = arith.constant dense<0.000000e+00> : vector<32x256xf32>
    %24 = tpu.matmul %21, %22, %cst_15 {dimension_numbers = #tpu.dot_dimension_numbers<[1], [0], [0], [1], [0, 0, 1, 1], [], []>} : vector<32x128xbf16>, vector<128x256xbf16>, vector<32x256xf32> -> vector<32x256xf32>
    %25 = vector.broadcast %23 : vector<1x256xf32> to vector<32x256xf32>
    %26 = arith.addf %24, %25 : vector<32x256xf32>
    %cst_16 = arith.constant 0.000000e+00 : f32
    %27 = vector.broadcast %cst_16 : f32 to vector<32x256xf32>
    %28 = arith.maximumf %26, %27 : vector<32x256xf32>
    %29 = vector.extract_strided_slice %28 {offsets = [0, 0], sizes = [32, 128], strides = [1, 1]} : vector<32x256xf32> to vector<32x128xf32>
    %30 = arith.truncf %29 : vector<32x128xf32> to vector<32x128xbf16>
    %c0_17 = arith.constant 0 : index
    %c0_18 = arith.constant 0 : index
    %31 = vector.load %arg6[%c0_17, %c0_18] : memref<64x128xbf16, #tpu.memory_space<vmem>>, vector<32x128xbf16>
    tpu.vector_store %arg6[%c0_17, %c0_18], %30 {strides = array<i32>} : memref<64x128xbf16, #tpu.memory_space<vmem>>, vector<32x128xbf16>,
    %32 = vector.extract_strided_slice %28 {offsets = [0, 128], sizes = [32, 128], strides = [1, 1]} : vector<32x256xf32> to vector<32x128xf32>
    %33 = arith.truncf %32 : vector<32x128xf32> to vector<32x128xbf16>
    %c32 = arith.constant 32 : index
    %c0_19 = arith.constant 0 : index
    %34 = vector.load %arg6[%c32, %c0_19] : memref<64x128xbf16, #tpu.memory_space<vmem>>, vector<32x128xbf16>
    tpu.vector_store %arg6[%c32, %c0_19], %33 {strides = array<i32>} : memref<64x128xbf16, #tpu.memory_space<vmem>>, vector<32x128xbf16>,
    %c0_20 = arith.constant 0 : index
    %c0_21 = arith.constant 0 : index
    %35 = vector.load %arg6[%c0_20, %c0_21] : memref<64x128xbf16, #tpu.memory_space<vmem>>, vector<64x128xbf16>
    %c384 = arith.constant 384 : index
    %c0_22 = arith.constant 0 : index
    %36 = vector.load %arg2[%c384, %c0_22] : memref<1280x512xbf16, #tpu.memory_space<vmem>>, vector<128x256xbf16>
    %c2 = arith.constant 2 : index
    %c0_23 = arith.constant 0 : index
    %37 = vector.load %arg3[%c2, %c0_23] : memref<8x512xf32, #tpu.memory_space<vmem>>, vector<1x256xf32>
    %cst_24 = arith.constant dense<0.000000e+00> : vector<64x256xf32>
    %38 = tpu.matmul %35, %36, %cst_24 {dimension_numbers = #tpu.dot_dimension_numbers<[1], [0], [0], [1], [0, 0, 1, 1], [], []>} : vector<64x128xbf16>, vector<128x256xbf16>, vector<64x256xf32> -> vector<64x256xf32>
    %39 = vector.broadcast %37 : vector<1x256xf32> to vector<64x256xf32>
    %40 = arith.addf %38, %39 : vector<64x256xf32>
    %cst_25 = arith.constant 0.000000e+00 : f32
    %41 = vector.broadcast %cst_25 : f32 to vector<64x256xf32>
    %42 = arith.maximumf %40, %41 : vector<64x256xf32>
    %43 = arith.truncf %42 : vector<64x256xf32> to vector<64x256xbf16>
    %c0_26 = arith.constant 0 : index
    %c0_27 = arith.constant 0 : index
    %44 = vector.load %arg7[%c0_26, %c0_27] : memref<64x256xbf16, #tpu.memory_space<vmem>>, vector<64x256xbf16>
    tpu.vector_store %arg7[%c0_26, %c0_27], %43 {strides = array<i32>} : memref<64x256xbf16, #tpu.memory_space<vmem>>, vector<64x256xbf16>,
    %c0_28 = arith.constant 0 : index
    %c0_29 = arith.constant 0 : index
    %45 = vector.load %arg7[%c0_28, %c0_29] : memref<64x256xbf16, #tpu.memory_space<vmem>>, vector<64x256xbf16>
    %c512 = arith.constant 512 : index
    %c0_30 = arith.constant 0 : index
    %46 = vector.load %arg2[%c512, %c0_30] : memref<1280x512xbf16, #tpu.memory_space<vmem>>, vector<256x512xbf16>
    %c3 = arith.constant 3 : index
    %c0_31 = arith.constant 0 : index
    %47 = vector.load %arg3[%c3, %c0_31] : memref<8x512xf32, #tpu.memory_space<vmem>>, vector<1x512xf32>
    %cst_32 = arith.constant dense<0.000000e+00> : vector<64x512xf32>
    %48 = tpu.matmul %45, %46, %cst_32 {dimension_numbers = #tpu.dot_dimension_numbers<[1], [0], [0], [1], [0, 0, 1, 1], [], []>} : vector<64x256xbf16>, vector<256x512xbf16>, vector<64x512xf32> -> vector<64x512xf32>
    %49 = vector.broadcast %47 : vector<1x512xf32> to vector<64x512xf32>
    %50 = arith.addf %48, %49 : vector<64x512xf32>
    %cst_33 = arith.constant 0.000000e+00 : f32
    %51 = vector.broadcast %cst_33 : f32 to vector<64x512xf32>
    %52 = arith.maximumf %50, %51 : vector<64x512xf32>
    %53 = arith.truncf %52 : vector<64x512xf32> to vector<64x512xbf16>
    %c0_34 = arith.constant 0 : index
    %c0_35 = arith.constant 0 : index
    %54 = vector.load %arg8[%c0_34, %c0_35] : memref<64x512xbf16, #tpu.memory_space<vmem>>, vector<64x512xbf16>
    tpu.vector_store %arg8[%c0_34, %c0_35], %53 {strides = array<i32>} : memref<64x512xbf16, #tpu.memory_space<vmem>>, vector<64x512xbf16>,
    %c0_36 = arith.constant 0 : index
    %c0_37 = arith.constant 0 : index
    %55 = vector.load %arg8[%c0_36, %c0_37] : memref<64x512xbf16, #tpu.memory_space<vmem>>, vector<64x512xbf16>
    %c768 = arith.constant 768 : index
    %c0_38 = arith.constant 0 : index
    %56 = vector.load %arg2[%c768, %c0_38] : memref<1280x512xbf16, #tpu.memory_space<vmem>>, vector<512x384xbf16>
    %c4 = arith.constant 4 : index
    %c0_39 = arith.constant 0 : index
    %57 = vector.load %arg3[%c4, %c0_39] : memref<8x512xf32, #tpu.memory_space<vmem>>, vector<1x384xf32>
    %cst_40 = arith.constant dense<0.000000e+00> : vector<64x384xf32>
    %58 = tpu.matmul %55, %56, %cst_40 {dimension_numbers = #tpu.dot_dimension_numbers<[1], [0], [0], [1], [0, 0, 1, 1], [], []>} : vector<64x512xbf16>, vector<512x384xbf16>, vector<64x384xf32> -> vector<64x384xf32>
    %59 = vector.broadcast %57 : vector<1x384xf32> to vector<64x384xf32>
    %60 = arith.addf %58, %59 : vector<64x384xf32>
    %cst_41 = arith.constant 0.000000e+00 : f32
    %61 = vector.broadcast %cst_41 : f32 to vector<64x384xf32>
    %62 = arith.maximumf %60, %61 : vector<64x384xf32>
    %c0_42 = arith.constant 0 : index
    %c0_43 = arith.constant 0 : index
    %63 = vector.load %arg4[%c0_42, %c0_43] : memref<64x384xf32, #tpu.memory_space<vmem>>, vector<64x384xf32>
    tpu.vector_store %arg4[%c0_42, %c0_43], %62 {strides = array<i32>} : memref<64x384xf32, #tpu.memory_space<vmem>>, vector<64x384xf32>,
    return
  }
  func.func @transform_0(%arg0: i32) -> (i32, i32) {
    %c0_i32 = arith.constant 0 : i32
    %c0_i32_0 = arith.constant 0 : i32
    return %arg0, %c0_i32 : i32, i32
  }
  func.func @transform_1(%arg0: i32) -> (i32, i32) {
    %c0_i32 = arith.constant 0 : i32
    %c0_i32_0 = arith.constant 0 : i32
    %c0_i32_1 = arith.constant 0 : i32
    return %c0_i32, %c0_i32_0 : i32, i32
  }
  func.func @transform_2(%arg0: i32) -> (i32, i32) {
    %c0_i32 = arith.constant 0 : i32
    %c0_i32_0 = arith.constant 0 : i32
    %c0_i32_1 = arith.constant 0 : i32
    return %c0_i32, %c0_i32_0 : i32, i32
  }
  func.func @transform_3(%arg0: i32) -> (i32, i32) {
    %c0_i32 = arith.constant 0 : i32
    %c0_i32_0 = arith.constant 0 : i32
    return %arg0, %c0_i32 : i32, i32
  }
}

</mosaic_0001>

<llo_original>
// kernel: conv_decoder_forward.1
$region0: #{conv_decoder_forward.1}
  #allocation0 [shape = 'u32[]', space=smem, size = 0x4, offset = 0x4, fixed_abs, tag = 'smem constant byte address 0x4 - core index']
  #allocation1 [shape = 'u32[144,128]{1,0:T(1,128)}', space=vmem, size = 0x12000, scoped, tag = 'internal scratch']
  #allocation2 [shape = 'bf16[32,128]{1,0:T(8,128)(2,1)}', space=vmem, size = 0x2000, scoped, tag = 'scratch operand']
  #allocation3 [shape = 'bf16[64,128]{1,0:T(8,128)(2,1)}', space=vmem, size = 0x4000, scoped, tag = 'scratch operand']
  #allocation4 [shape = 'bf16[64,256]{1,0:T(8,128)(2,1)}', space=vmem, size = 0x8000, scoped, tag = 'scratch operand']
  #allocation5 [shape = 'bf16[64,512]{1,0:T(8,128)(2,1)}', space=vmem, size = 0x10000, scoped, tag = 'scratch operand']
  %s0 = inlined_call_operand.vmem [shape: f32[8,256], index: 0, kind: input, shape index: {}]
  %s1 = inlined_call_operand.hbm [shape: bf16[1280,512], index: 1, kind: input, shape index: {}]
  %s2 = inlined_call_operand.hbm [shape: f32[8,512], index: 2, kind: input, shape index: {}]
  %s3 = inlined_call_operand.vmem [shape: f32[64,384], index: 3, kind: output, shape index: {}]
  %s4 = sld [smem:[#allocation0]]
  $region30: #{conv_decoder_forward.1} parent=0
    _
  %s6 = ssub.s32 1, %s4
  %s7 = scalar_select 0, %s6, %s4
  $region1: #{conv_decoder_forward.1} parent=0
    #allocation6 [shape = 'u8[1310720]{0}', space=vmem, size = 0x140000, scoped, tag = 'input window, operand 1, single buffered']
    #allocation7 [shape = 's32[1]{0}', space=sflag, size = 0x4, scoped, tag = 'scoped memory for conv_decoder_forward.1']
    #allocation8 [shape = 'u8[16384]{0}', space=vmem, size = 0x4000, scoped, tag = 'input window, operand 2, single buffered']
    #allocation9 [shape = 's32[1]{0}', space=sflag, size = 0x4, scoped, tag = 'scoped memory for conv_decoder_forward.1']
    %8 = vsyncpa [#allocation7], 0
    %9 = vsyncpa [#allocation9], 0
    // Predicated region
    $region2: #{conv_decoder_forward.1} parent=1 // pred_check
      _
    $region3: #{conv_decoder_forward.1} parent=1 // pred_check_branch
      %11 = sbr.rel (0) target = $region5
    $region4: #{conv_decoder_forward.1} parent=1 // pred_region
      _
    $region5: #{conv_decoder_forward.1} parent=1 // pred_fallthru
      _
    // Predicated region
    $region6: #{conv_decoder_forward.1} parent=1 // pred_check
      _
    $region7: #{conv_decoder_forward.1} parent=1 // pred_check_branch
      %13 = sbr.rel (0) target = $region9
    $region8: #{conv_decoder_forward.1} parent=1 // pred_region
      %s15 = ssub.s32 40960, 40960
      %16 = vsyncadd [#allocation7], %s15
      %s17 = sshll.u32 [#allocation6], 4
      %s18 = int_to_ptr.vmem [resolvable:$true] %s17
      %23 = dma.hbm_to_vmem [thread:$0]  %s1, 40960, %s18, [#allocation7], 256, 256, 16
    $region9: #{conv_decoder_forward.1} parent=1 // pred_fallthru
      _
    // Predicated region
    $region10: #{conv_decoder_forward.1} parent=1 // pred_check
      _
    $region11: #{conv_decoder_forward.1} parent=1 // pred_check_branch
      %25 = sbr.rel (0) target = $region13
    $region12: #{conv_decoder_forward.1} parent=1 // pred_region
      %s27 = ssub.s32 512, 512
      %28 = vsyncadd [#allocation9], %s27
      %s30 = sshll.u32 [#allocation8], 4
      %s31 = int_to_ptr.vmem [resolvable:$true] %s30
      %33 = dma.hbm_to_vmem [thread:$0]  %s2, 512, %s31, [#allocation9]
    $region13: #{conv_decoder_forward.1} parent=1 // pred_fallthru
      _
    // Predicated region
    $region14: #{conv_decoder_forward.1} parent=1 // pred_check
      _
    $region15: #{conv_decoder_forward.1} parent=1 // pred_check_branch
      %35 = sbr.rel (0) target = $region17
    $region16: #{conv_decoder_forward.1} parent=1 // pred_region
      %36 = dma.done [#allocation7], 40960
    $region17: #{conv_decoder_forward.1} parent=1 // pred_fallthru
      _
    // Predicated region
    $region18: #{conv_decoder_forward.1} parent=1 // pred_check
      _
    $region19: #{conv_decoder_forward.1} parent=1 // pred_check_branch
      %38 = sbr.rel (0) target = $region21
    $region20: #{conv_decoder_forward.1} parent=1 // pred_region
      %39 = dma.done [#allocation9], 512
    $region21: #{conv_decoder_forward.1} parent=1 // pred_fallthru
      _
    %v41 = vld [vmem:[%s0] sm:$0xff]
    %v42 = vld [vmem:[%s0 + $0x8] sm:$0xff]
    %v43 = vpack.c.bf16 %v41, %v41
    %v44 = vpack.c.bf16 %v42, %v42
    %v45 = vld [vmem:[#allocation6] sm:$0xff]
    %v46 = vld [vmem:[#allocation6 + $0x8] sm:$0xff]
    %v47 = vld [vmem:[#allocation6 + $0x10] sm:$0xff]
    %v48 = vld [vmem:[#allocation6 + $0x18] sm:$0xff]
    %v49 = vld [vmem:[#allocation6 + $0x20] sm:$0xff]
    %v50 = vld [vmem:[#allocation6 + $0x28] sm:$0xff]
    %v51 = vld [vmem:[#allocation6 + $0x30] sm:$0xff]
    %v52 = vld [vmem:[#allocation6 + $0x38] sm:$0xff]
    %v53 = vld [vmem:[#allocation6 + $0x40] sm:$0xff]
    %v54 = vld [vmem:[#allocation6 + $0x48] sm:$0xff]
    %v55 = vld [vmem:[#allocation6 + $0x50] sm:$0xff]
    %v56 = vld [vmem:[#allocation6 + $0x58] sm:$0xff]
    %v57 = vld [vmem:[#allocation6 + $0x60] sm:$0xff]
    %v58 = vld [vmem:[#allocation6 + $0x68] sm:$0xff]
    %v59 = vld [vmem:[#allocation6 + $0x70] sm:$0xff]
    %v60 = vld [vmem:[#allocation6 + $0x78] sm:$0xff]
    %v61 = vld [vmem:[#allocation6 + $0x80] sm:$0xff]
    %v62 = vld [vmem:[#allocation6 + $0x88] sm:$0xff]
    %v63 = vld [vmem:[#allocation6 + $0x90] sm:$0xff]
    %v64 = vld [vmem:[#allocation6 + $0x98] sm:$0xff]
    %v65 = vld [vmem:[#allocation6 + $0xa0] sm:$0xff]
    %v66 = vld [vmem:[#allocation6 + $0xa8] sm:$0xff]
    %v67 = vld [vmem:[#allocation6 + $0xb0] sm:$0xff]
    %v68 = vld [vmem:[#allocation6 + $0xb8] sm:$0xff]
    %v69 = vld [vmem:[#allocation6 + $0xc0] sm:$0xff]
    %v70 = vld [vmem:[#allocation6 + $0xc8] sm:$0xff]
    %v71 = vld [vmem:[#allocation6 + $0xd0] sm:$0xff]
    %v72 = vld [vmem:[#allocation6 + $0xd8] sm:$0xff]
    %v73 = vld [vmem:[#allocation6 + $0xe0] sm:$0xff]
    %v74 = vld [vmem:[#allocation6 + $0xe8] sm:$0xff]
    %v75 = vld [vmem:[#allocation6 + $0xf0] sm:$0xff]
    %v76 = vld [vmem:[#allocation6 + $0xf8] sm:$0xff]
    %v77 = vld [vmem:[#allocation6 + $0x100] sm:$0xff]
    %v78 = vld [vmem:[#allocation6 + $0x108] sm:$0xff]
    %v79 = vld [vmem:[#allocation6 + $0x110] sm:$0xff]
    %v80 = vld [vmem:[#allocation6 + $0x118] sm:$0xff]
    %v81 = vld [vmem:[#allocation6 + $0x120] sm:$0xff]
    %v82 = vld [vmem:[#allocation6 + $0x128] sm:$0xff]
    %v83 = vld [vmem:[#allocation6 + $0x130] sm:$0xff]
    %v84 = vld [vmem:[#allocation6 + $0x138] sm:$0xff]
    %v85 = vld [vmem:[#allocation6 + $0x140] sm:$0xff]
    %v86 = vld [vmem:[#allocation6 + $0x148] sm:$0xff]
    %v87 = vld [vmem:[#allocation6 + $0x150] sm:$0xff]
    %v88 = vld [vmem:[#allocation6 + $0x158] sm:$0xff]
    %v89 = vld [vmem:[#allocation6 + $0x160] sm:$0xff]
    %v90 = vld [vmem:[#allocation6 + $0x168] sm:$0xff]
    %v91 = vld [vmem:[#allocation6 + $0x170] sm:$0xff]
    %v92 = vld [vmem:[#allocation6 + $0x178] sm:$0xff]
    %v93 = vld [vmem:[#allocation6 + $0x180] sm:$0xff]
    %v94 = vld [vmem:[#allocation6 + $0x188] sm:$0xff]
    %v95 = vld [vmem:[#allocation6 + $0x190] sm:$0xff]
    %v96 = vld [vmem:[#allocation6 + $0x198] sm:$0xff]
    %v97 = vld [vmem:[#allocation6 + $0x1a0] sm:$0xff]
    %v98 = vld [vmem:[#allocation6 + $0x1a8] sm:$0xff]
    %v99 = vld [vmem:[#allocation6 + $0x1b0] sm:$0xff]
    %v100 = vld [vmem:[#allocation6 + $0x1b8] sm:$0xff]
    %v101 = vld [vmem:[#allocation6 + $0x1c0] sm:$0xff]
    %v102 = vld [vmem:[#allocation6 + $0x1c8] sm:$0xff]
    %v103 = vld [vmem:[#allocation6 + $0x1d0] sm:$0xff]
    %v104 = vld [vmem:[#allocation6 + $0x1d8] sm:$0xff]
    %v105 = vld [vmem:[#allocation6 + $0x1e0] sm:$0xff]
    %v106 = vld [vmem:[#allocation6 + $0x1e8] sm:$0xff]
    %v107 = vld [vmem:[#allocation6 + $0x1f0] sm:$0xff]
    %v108 = vld [vmem:[#allocation6 + $0x1f8] sm:$0xff]
    %v109 = vld [vmem:[#allocation8] ss:$8 sm:$0xf]
    %v111 = vlaneseq
    %v112 = vshrl.u32 %v111, 7
    %v113 = vsub.s32 0, %v112
    %v114 = vrot.slane %v109, %v113
    %v115 = vlaneseq
    %v116 = vshrl.u32 %v115, 7
    %v117 = vsub.s32 1, %v116
    %v118 = vrot.slane %v109, %v117
    %v119 = vlaneseq
    %v120 = vshrl.u32 %v119, 7
    %v121 = vsub.s32 2, %v120
    %v122 = vrot.slane %v109, %v121
    %v123 = vlaneseq
    %v124 = vshrl.u32 %v123, 7
    %v125 = vsub.s32 3, %v124
    %v126 = vrot.slane %v109, %v125
    %v195 = vunpack.c.l.b16 %v45
    %v196 = vunpack.c.h.b16 %v45
    %v197 = vunpack.c.l.b16 %v46
    %v198 = vunpack.c.h.b16 %v46
    %v199 = vunpack.c.l.b16 %v47
    %v200 = vunpack.c.h.b16 %v47
    %v201 = vunpack.c.l.b16 %v48
    %v202 = vunpack.c.h.b16 %v48
    %v203 = vunpack.c.l.b16 %v49
    %v204 = vunpack.c.h.b16 %v49
    %v205 = vunpack.c.l.b16 %v50
    %v206 = vunpack.c.h.b16 %v50
    %v207 = vunpack.c.l.b16 %v51
    %v208 = vunpack.c.h.b16 %v51
    %v209 = vunpack.c.l.b16 %v52
    %v210 = vunpack.c.h.b16 %v52
    %v211 = vunpack.c.l.b16 %v53
    %v212 = vunpack.c.h.b16 %v53
    %v213 = vunpack.c.l.b16 %v54
    %v214 = vunpack.c.h.b16 %v54
    %v215 = vunpack.c.l.b16 %v55
    %v216 = vunpack.c.h.b16 %v55
    %v217 = vunpack.c.l.b16 %v56
    %v218 = vunpack.c.h.b16 %v56
    %v219 = vunpack.c.l.b16 %v57
    %v220 = vunpack.c.h.b16 %v57
    %v221 = vunpack.c.l.b16 %v58
    %v222 = vunpack.c.h.b16 %v58
    %v223 = vunpack.c.l.b16 %v59
    %v224 = vunpack.c.h.b16 %v59
    %v225 = vunpack.c.l.b16 %v60
    %v226 = vunpack.c.h.b16 %v60
    %v227 = vunpack.c.l.b16 %v61
    %v228 = vunpack.c.h.b16 %v61
    %v229 = vunpack.c.l.b16 %v62
    %v230 = vunpack.c.h.b16 %v62
    %v231 = vunpack.c.l.b16 %v63
    %v232 = vunpack.c.h.b16 %v63
    %v233 = vunpack.c.l.b16 %v64
    %v234 = vunpack.c.h.b16 %v64
    %v235 = vunpack.c.l.b16 %v65
    %v236 = vunpack.c.h.b16 %v65
    %v237 = vunpack.c.l.b16 %v66
    %v238 = vunpack.c.h.b16 %v66
    %v239 = vunpack.c.l.b16 %v67
    %v240 = vunpack.c.h.b16 %v67
    %v241 = vunpack.c.l.b16 %v68
    %v242 = vunpack.c.h.b16 %v68
    %v243 = vunpack.c.l.b16 %v69
    %v244 = vunpack.c.h.b16 %v69
    %v245 = vunpack.c.l.b16 %v70
    %v246 = vunpack.c.h.b16 %v70
    %v247 = vunpack.c.l.b16 %v71
    %v248 = vunpack.c.h.b16 %v71
    %v249 = vunpack.c.l.b16 %v72
    %v250 = vunpack.c.h.b16 %v72
    %v251 = vunpack.c.l.b16 %v73
    %v252 = vunpack.c.h.b16 %v73
    %v253 = vunpack.c.l.b16 %v74
    %v254 = vunpack.c.h.b16 %v74
    %v255 = vunpack.c.l.b16 %v75
    %v256 = vunpack.c.h.b16 %v75
    %v257 = vunpack.c.l.b16 %v76
    %v258 = vunpack.c.h.b16 %v76
    %v259 = vunpack.c.l.b16 %v77
    %v260 = vunpack.c.h.b16 %v77
    %v261 = vunpack.c.l.b16 %v78
    %v262 = vunpack.c.h.b16 %v78
    %v263 = vunpack.c.l.b16 %v79
    %v264 = vunpack.c.h.b16 %v79
    %v265 = vunpack.c.l.b16 %v80
    %v266 = vunpack.c.h.b16 %v80
    %v267 = vunpack.c.l.b16 %v81
    %v268 = vunpack.c.h.b16 %v81
    %v269 = vunpack.c.l.b16 %v82
    %v270 = vunpack.c.h.b16 %v82
    %v271 = vunpack.c.l.b16 %v83
    %v272 = vunpack.c.h.b16 %v83
    %v273 = vunpack.c.l.b16 %v84
    %v274 = vunpack.c.h.b16 %v84
    %v275 = vunpack.c.l.b16 %v85
    %v276 = vunpack.c.h.b16 %v85
    %v277 = vunpack.c.l.b16 %v86
    %v278 = vunpack.c.h.b16 %v86
    %v279 = vunpack.c.l.b16 %v87
    %v280 = vunpack.c.h.b16 %v87
    %v281 = vunpack.c.l.b16 %v88
    %v282 = vunpack.c.h.b16 %v88
    %v283 = vunpack.c.l.b16 %v89
    %v284 = vunpack.c.h.b16 %v89
    %v285 = vunpack.c.l.b16 %v90
    %v286 = vunpack.c.h.b16 %v90
    %v287 = vunpack.c.l.b16 %v91
    %v288 = vunpack.c.h.b16 %v91
    %v289 = vunpack.c.l.b16 %v92
    %v290 = vunpack.c.h.b16 %v92
    %v291 = vunpack.c.l.b16 %v93
    %v292 = vunpack.c.h.b16 %v93
    %v293 = vunpack.c.l.b16 %v94
    %v294 = vunpack.c.h.b16 %v94
    %v295 = vunpack.c.l.b16 %v95
    %v296 = vunpack.c.h.b16 %v95
    %v297 = vunpack.c.l.b16 %v96
    %v298 = vunpack.c.h.b16 %v96
    %v299 = vunpack.c.l.b16 %v97
    %v300 = vunpack.c.h.b16 %v97
    %v301 = vunpack.c.l.b16 %v98
    %v302 = vunpack.c.h.b16 %v98
    %v303 = vunpack.c.l.b16 %v99
    %v304 = vunpack.c.h.b16 %v99
    %v305 = vunpack.c.l.b16 %v100
    %v306 = vunpack.c.h.b16 %v100
    %v307 = vunpack.c.l.b16 %v101
    %v308 = vunpack.c.h.b16 %v101
    %v309 = vunpack.c.l.b16 %v102
    %v310 = vunpack.c.h.b16 %v102
    %v311 = vunpack.c.l.b16 %v103
    %v312 = vunpack.c.h.b16 %v103
    %v313 = vunpack.c.l.b16 %v104
    %v314 = vunpack.c.h.b16 %v104
    %v315 = vunpack.c.l.b16 %v105
    %v316 = vunpack.c.h.b16 %v105
    %v317 = vunpack.c.l.b16 %v106
    %v318 = vunpack.c.h.b16 %v106
    %v319 = vunpack.c.l.b16 %v107
    %v320 = vunpack.c.h.b16 %v107
    %v321 = vunpack.c.l.b16 %v108
    %v322 = vunpack.c.h.b16 %v108
    %v323 = vpack.c.b16 %v199, %v195
    %v324 = vpack.c.b16 %v200, %v196
    %v325 = vpack.c.b16 %v201, %v197
    %v326 = vpack.c.b16 %v202, %v198
    %v327 = vpack.c.b16 %v207, %v203
    %v328 = vpack.c.b16 %v208, %v204
    %v329 = vpack.c.b16 %v209, %v205
    %v330 = vpack.c.b16 %v210, %v206
    %v331 = vpack.c.b16 %v215, %v211
    %v332 = vpack.c.b16 %v216, %v212
    %v333 = vpack.c.b16 %v217, %v213
    %v334 = vpack.c.b16 %v218, %v214
    %v335 = vpack.c.b16 %v223, %v219
    %v336 = vpack.c.b16 %v224, %v220
    %v337 = vpack.c.b16 %v225, %v221
    %v338 = vpack.c.b16 %v226, %v222
    %v339 = vpack.c.b16 %v231, %v227
    %v340 = vpack.c.b16 %v232, %v228
    %v341 = vpack.c.b16 %v233, %v229
    %v342 = vpack.c.b16 %v234, %v230
    %v343 = vpack.c.b16 %v239, %v235
    %v344 = vpack.c.b16 %v240, %v236
    %v345 = vpack.c.b16 %v241, %v237
    %v346 = vpack.c.b16 %v242, %v238
    %v347 = vpack.c.b16 %v247, %v243
    %v348 = vpack.c.b16 %v248, %v244
    %v349 = vpack.c.b16 %v249, %v245
    %v350 = vpack.c.b16 %v250, %v246
    %v351 = vpack.c.b16 %v255, %v251
    %v352 = vpack.c.b16 %v256, %v252
    %v353 = vpack.c.b16 %v257, %v253
    %v354 = vpack.c.b16 %v258, %v254
    %v355 = vpack.c.b16 %v263, %v259
    %v356 = vpack.c.b16 %v264, %v260
    %v357 = vpack.c.b16 %v265, %v261
    %v358 = vpack.c.b16 %v266, %v262
    %v359 = vpack.c.b16 %v271, %v267
    %v360 = vpack.c.b16 %v272, %v268
    %v361 = vpack.c.b16 %v273, %v269
    %v362 = vpack.c.b16 %v274, %v270
    %v363 = vpack.c.b16 %v279, %v275
    %v364 = vpack.c.b16 %v280, %v276
    %v365 = vpack.c.b16 %v281, %v277
    %v366 = vpack.c.b16 %v282, %v278
    %v367 = vpack.c.b16 %v287, %v283
    %v368 = vpack.c.b16 %v288, %v284
    %v369 = vpack.c.b16 %v289, %v285
    %v370 = vpack.c.b16 %v290, %v286
    %v371 = vpack.c.b16 %v295, %v291
    %v372 = vpack.c.b16 %v296, %v292
    %v373 = vpack.c.b16 %v297, %v293
    %v374 = vpack.c.b16 %v298, %v294
    %v375 = vpack.c.b16 %v303, %v299
    %v376 = vpack.c.b16 %v304, %v300
    %v377 = vpack.c.b16 %v305, %v301
    %v378 = vpack.c.b16 %v306, %v302
    %v379 = vpack.c.b16 %v311, %v307
    %v380 = vpack.c.b16 %v312, %v308
    %v381 = vpack.c.b16 %v313, %v309
    %v382 = vpack.c.b16 %v314, %v310
    %v383 = vpack.c.b16 %v319, %v315
    %v384 = vpack.c.b16 %v320, %v316
    %v385 = vpack.c.b16 %v321, %v317
    %v386 = vpack.c.b16 %v322, %v318
    %451 = vmatprep.subr.bf16.mxu0 %v352
    %452 = vmatpush1.bf16.msra.mxu0 %v351
    %453 = vmatprep.subr.bf16.mxu0 %v348
    %454 = vmatpush1.bf16.msra.mxu0 %v347
    %455 = vmatprep.subr.bf16.mxu0 %v344
    %456 = vmatpush1.bf16.msra.mxu0 %v343
    %457 = vmatprep.subr.bf16.mxu0 %v340
    %458 = vmatpush1.bf16.msra.mxu0 %v339
    %459 = vmatprep.subr.bf16.mxu0 %v336
    %460 = vmatpush1.bf16.msra.mxu0 %v335
    %461 = vmatprep.subr.bf16.mxu0 %v332
    %462 = vmatpush1.bf16.msra.mxu0 %v331
    %463 = vmatprep.subr.bf16.mxu0 %v328
    %464 = vmatpush1.bf16.msra.mxu0 %v327
    %465 = vmatprep.subr.bf16.mxu0 %v324
    %466 = vmatpush1.bf16.msra.mxu0 %v323
    %467 = vmatprep.subr.bf16.mxu0 %v384
    %468 = vmatpush2.bf16.msra.mxu0 %v383
    %469 = vmatprep.subr.bf16.mxu0 %v380
    %470 = vmatpush2.bf16.msra.mxu0 %v379
    %471 = vmatprep.subr.bf16.mxu0 %v376
    %472 = vmatpush2.bf16.msra.mxu0 %v375
    %473 = vmatprep.subr.bf16.mxu0 %v372
    %474 = vmatpush2.bf16.msra.mxu0 %v371
    %475 = vmatprep.subr.bf16.mxu0 %v368
    %476 = vmatpush2.bf16.msra.mxu0 %v367
    %477 = vmatprep.subr.bf16.mxu0 %v364
    %478 = vmatpush2.bf16.msra.mxu0 %v363
    %479 = vmatprep.subr.bf16.mxu0 %v360
    %480 = vmatpush2.bf16.msra.mxu0 %v359
    %481 = vmatprep.subr.bf16.mxu0 %v356
    %482 = vmatpush2.bf16.msra.mxu0 %v355
    %483 = vmatprep.mubr.bf16.mxu0 %v44
    %484 = vmatmul.mubr.bf16.gmra.mxu0 %v43
    %v485 = vpop.f32.mrf.mxu0
    %v486 = vadd.f32 %v114, %v485
    %v487 = vpop.f32.mrf.mxu0
    %v488 = vadd.f32 %v118, %v487
    %v489 = vpop.f32.mrf.mxu0
    %v490 = vpop.f32.mrf.mxu0
    %491 = vdwg.mxu0
    %492 = vmatprep.subr.bf16.mxu0 %v354
    %493 = vmatpush1.bf16.msra.mxu0 %v353
    %494 = vmatprep.subr.bf16.mxu0 %v350
    %495 = vmatpush1.bf16.msra.mxu0 %v349
    %496 = vmatprep.subr.bf16.mxu0 %v346
    %497 = vmatpush1.bf16.msra.mxu0 %v345
    %498 = vmatprep.subr.bf16.mxu0 %v342
    %499 = vmatpush1.bf16.msra.mxu0 %v341
    %500 = vmatprep.subr.bf16.mxu0 %v338
    %501 = vmatpush1.bf16.msra.mxu0 %v337
    %502 = vmatprep.subr.bf16.mxu0 %v334
    %503 = vmatpush1.bf16.msra.mxu0 %v333
    %504 = vmatprep.subr.bf16.mxu0 %v330
    %505 = vmatpush1.bf16.msra.mxu0 %v329
    %506 = vmatprep.subr.bf16.mxu0 %v326
    %507 = vmatpush1.bf16.msra.mxu0 %v325
    %508 = vmatprep.subr.bf16.mxu0 %v386
    %509 = vmatpush2.bf16.msra.mxu0 %v385
    %510 = vmatprep.subr.bf16.mxu0 %v382
    %511 = vmatpush2.bf16.msra.mxu0 %v381
    %512 = vmatprep.subr.bf16.mxu0 %v378
    %513 = vmatpush2.bf16.msra.mxu0 %v377
    %514 = vmatprep.subr.bf16.mxu0 %v374
    %515 = vmatpush2.bf16.msra.mxu0 %v373
    %516 = vmatprep.subr.bf16.mxu0 %v370
    %517 = vmatpush2.bf16.msra.mxu0 %v369
    %518 = vmatprep.subr.bf16.mxu0 %v366
    %519 = vmatpush2.bf16.msra.mxu0 %v365
    %520 = vmatprep.subr.bf16.mxu0 %v362
    %521 = vmatpush2.bf16.msra.mxu0 %v361
    %522 = vmatprep.subr.bf16.mxu0 %v358
    %523 = vmatpush2.bf16.msra.mxu0 %v357
    %524 = vmatprep.mubr.bf16.mxu0 %v44
    %525 = vmatmul.mubr.bf16.gmra.mxu0 %v43
    %v526 = vpop.f32.mrf.mxu0
    %v527 = vadd.f32 %v122, %v526
    %v528 = vpop.f32.mrf.mxu0
    %v529 = vadd.f32 %v126, %v528
    %v530 = vpop.f32.mrf.mxu0
    %v531 = vpop.f32.mrf.mxu0
    %532 = vdwg.mxu0
    %v533 = vmax.f32 %v486, 0.0
    %v534 = vmax.f32 %v488, 0.0
    %v535 = vmax.f32 %v527, 0.0
    %v536 = vmax.f32 %v529, 0.0
    %v537 = vpack.c.bf16 %v533, %v533
    %538 = vst [vmem:[#allocation2] sm:$0xf] %v537
    %v539 = vpack.c.bf16 %v534, %v534
    %540 = vst [vmem:[#allocation2 + $0x4] sm:$0xf] %v539
    %v541 = vpack.c.bf16 %v535, %v535
    %542 = vst [vmem:[#allocation2 + $0x8] sm:$0xf] %v541
    %v543 = vpack.c.bf16 %v536, %v536
    %544 = vst [vmem:[#allocation2 + $0xc] sm:$0xf] %v543
    %v545 = vld [vmem:[#allocation2] sm:$0xf]
    %v546 = vld [vmem:[#allocation2 + $0x4] sm:$0xf]
    %v547 = vld [vmem:[#allocation2 + $0x8] sm:$0xf]
    %v548 = vld [vmem:[#allocation2 + $0xc] sm:$0xf]
    %v549 = vld [vmem:[#allocation6 + $0x200] sm:$0xff]
    %v550 = vld [vmem:[#allocation6 + $0x210] sm:$0xff]
    %v551 = vld [vmem:[#allocation6 + $0x220] sm:$0xff]
    %v552 = vld [vmem:[#allocation6 + $0x230] sm:$0xff]
    %v553 = vld [vmem:[#allocation6 + $0x240] sm:$0xff]
    %v554 = vld [vmem:[#allocation6 + $0x250] sm:$0xff]
    %v555 = vld [vmem:[#allocation6 + $0x260] sm:$0xff]
    %v556 = vld [vmem:[#allocation6 + $0x270] sm:$0xff]
    %v557 = vld [vmem:[#allocation6 + $0x280] sm:$0xff]
    %v558 = vld [vmem:[#allocation6 + $0x290] sm:$0xff]
    %v559 = vld [vmem:[#allocation6 + $0x2a0] sm:$0xff]
    %v560 = vld [vmem:[#allocation6 + $0x2b0] sm:$0xff]
    %v561 = vld [vmem:[#allocation6 + $0x2c0] sm:$0xff]
    %v562 = vld [vmem:[#allocation6 + $0x2d0] sm:$0xff]
    %v563 = vld [vmem:[#allocation6 + $0x2e0] sm:$0xff]
    %v564 = vld [vmem:[#allocation6 + $0x2f0] sm:$0xff]
    %s565 = scalar_lea.vmem [#allocation8], 1
    %v566 = vld [vmem:[%s565] ss:$8 sm:$0x3]
    %v568 = vlaneseq
    %v569 = vshrl.u32 %v568, 7
    %v570 = vsub.s32 0, %v569
    %v571 = vrot.slane %v566, %v570
    %v572 = vlaneseq
    %v573 = vshrl.u32 %v572, 7
    %v574 = vsub.s32 1, %v573
    %v575 = vrot.slane %v566, %v574
    %v582 = vunpack.c.l.b16 %v545
    %v583 = vunpack.c.l.b16 %v546
    %v584 = vunpack.c.l.b16 %v547
    %v585 = vunpack.c.l.b16 %v548
    %v586 = vpack.c.b16 %v583, %v582
    %v587 = vpack.c.b16 %v585, %v584
    %v606 = vunpack.c.l.b16 %v549
    %v607 = vunpack.c.h.b16 %v549
    %v608 = vunpack.c.l.b16 %v550
    %v609 = vunpack.c.h.b16 %v550
    %v610 = vunpack.c.l.b16 %v551
    %v611 = vunpack.c.h.b16 %v551
    %v612 = vunpack.c.l.b16 %v552
    %v613 = vunpack.c.h.b16 %v552
    %v614 = vunpack.c.l.b16 %v553
    %v615 = vunpack.c.h.b16 %v553
    %v616 = vunpack.c.l.b16 %v554
    %v617 = vunpack.c.h.b16 %v554
    %v618 = vunpack.c.l.b16 %v555
    %v619 = vunpack.c.h.b16 %v555
    %v620 = vunpack.c.l.b16 %v556
    %v621 = vunpack.c.h.b16 %v556
    %v622 = vunpack.c.l.b16 %v557
    %v623 = vunpack.c.h.b16 %v557
    %v624 = vunpack.c.l.b16 %v558
    %v625 = vunpack.c.h.b16 %v558
    %v626 = vunpack.c.l.b16 %v559
    %v627 = vunpack.c.h.b16 %v559
    %v628 = vunpack.c.l.b16 %v560
    %v629 = vunpack.c.h.b16 %v560
    %v630 = vunpack.c.l.b16 %v561
    %v631 = vunpack.c.h.b16 %v561
    %v632 = vunpack.c.l.b16 %v562
    %v633 = vunpack.c.h.b16 %v562
    %v634 = vunpack.c.l.b16 %v563
    %v635 = vunpack.c.h.b16 %v563
    %v636 = vunpack.c.l.b16 %v564
    %v637 = vunpack.c.h.b16 %v564
    %v638 = vpack.c.b16 %v608, %v606
    %v639 = vpack.c.b16 %v609, %v607
    %v640 = vpack.c.b16 %v612, %v610
    %v641 = vpack.c.b16 %v613, %v611
    %v642 = vpack.c.b16 %v616, %v614
    %v643 = vpack.c.b16 %v617, %v615
    %v644 = vpack.c.b16 %v620, %v618
    %v645 = vpack.c.b16 %v621, %v619
    %v646 = vpack.c.b16 %v624, %v622
    %v647 = vpack.c.b16 %v625, %v623
    %v648 = vpack.c.b16 %v628, %v626
    %v649 = vpack.c.b16 %v629, %v627
    %v650 = vpack.c.b16 %v632, %v630
    %v651 = vpack.c.b16 %v633, %v631
    %v652 = vpack.c.b16 %v636, %v634
    %v653 = vpack.c.b16 %v637, %v635
    %670 = vmatprep.subr.bf16.mxu0 %v653
    %671 = vmatpush1.bf16.msra.mxu0 %v652
    %672 = vmatprep.subr.bf16.mxu0 %v651
    %673 = vmatpush1.bf16.msra.mxu0 %v650
    %674 = vmatprep.subr.bf16.mxu0 %v649
    %675 = vmatpush1.bf16.msra.mxu0 %v648
    %676 = vmatprep.subr.bf16.mxu0 %v647
    %677 = vmatpush1.bf16.msra.mxu0 %v646
    %678 = vmatprep.subr.bf16.mxu0 %v645
    %679 = vmatpush1.bf16.msra.mxu0 %v644
    %680 = vmatprep.subr.bf16.mxu0 %v643
    %681 = vmatpush1.bf16.msra.mxu0 %v642
    %682 = vmatprep.subr.bf16.mxu0 %v641
    %683 = vmatpush1.bf16.msra.mxu0 %v640
    %684 = vmatprep.subr.bf16.mxu0 %v639
    %685 = vmatpush1.bf16.msra.mxu0 %v638
    %686 = vmatprep.subr.bf16.mxu0 0
    %687 = vmatpush2.bf16.msra.mxu0 0
    %688 = vmatprep.subr.bf16.mxu0 0
    %689 = vmatpush2.bf16.msra.mxu0 0
    %690 = vmatprep.subr.bf16.mxu0 0
    %691 = vmatpush2.bf16.msra.mxu0 0
    %692 = vmatprep.subr.bf16.mxu0 0
    %693 = vmatpush2.bf16.msra.mxu0 0
    %694 = vmatprep.subr.bf16.mxu0 0
    %695 = vmatpush2.bf16.msra.mxu0 0
    %696 = vmatprep.subr.bf16.mxu0 0
    %697 = vmatpush2.bf16.msra.mxu0 0
    %698 = vmatprep.subr.bf16.mxu0 0
    %699 = vmatpush2.bf16.msra.mxu0 0
    %700 = vmatprep.subr.bf16.mxu0 0
    %701 = vmatpush2.bf16.msra.mxu0 0
    %702 = vmatprep.mubr.bf16.mxu0 0
    %703 = vmatmul.mubr.bf16.gmra.mxu0 %v586
    %v704 = vpop.f32.mrf.mxu0
    %v705 = vadd.f32 %v571, %v704
    %v706 = vpop.f32.mrf.mxu0
    %v707 = vadd.f32 %v575, %v706
    %v708 = vpop.f32.mrf.mxu0
    %v709 = vadd.f32 %v571, %v708
    %v710 = vpop.f32.mrf.mxu0
    %v711 = vadd.f32 %v575, %v710
    %712 = vmatprep.mubr.bf16.mxu0 0
    %713 = vmatmul.mubr.bf16.gmra.mxu0 %v587
    %v714 = vpop.f32.mrf.mxu0
    %v715 = vadd.f32 %v571, %v714
    %v716 = vpop.f32.mrf.mxu0
    %v717 = vadd.f32 %v575, %v716
    %v718 = vpop.f32.mrf.mxu0
    %v719 = vadd.f32 %v571, %v718
    %v720 = vpop.f32.mrf.mxu0
    %v721 = vadd.f32 %v575, %v720
    %722 = vdwg.mxu0
    %v723 = vmax.f32 %v705, 0.0
    %v724 = vmax.f32 %v707, 0.0
    %v725 = vmax.f32 %v709, 0.0
    %v726 = vmax.f32 %v711, 0.0
    %v727 = vmax.f32 %v715, 0.0
    %v728 = vmax.f32 %v717, 0.0
    %v729 = vmax.f32 %v719, 0.0
    %v730 = vmax.f32 %v721, 0.0
    %v731 = vpack.c.bf16 %v725, %v723
    %v732 = vpack.c.bf16 %v729, %v727
    %v735 = vunpack.c.l.b16 %v731
    %v736 = vunpack.c.h.b16 %v731
    %v737 = vunpack.c.l.b16 %v732
    %v738 = vunpack.c.h.b16 %v732
    %v739 = vpack.c.b16 %v735, %v735
    %v740 = vpack.c.b16 %v736, %v736
    %v741 = vpack.c.b16 %v737, %v737
    %v742 = vpack.c.b16 %v738, %v738
    %747 = vst [vmem:[#allocation3] sm:$0xf] %v739
    %748 = vst [vmem:[#allocation3 + $0x4] sm:$0xf] %v740
    %749 = vst [vmem:[#allocation3 + $0x8] sm:$0xf] %v741
    %750 = vst [vmem:[#allocation3 + $0xc] sm:$0xf] %v742
    %v751 = vpack.c.bf16 %v726, %v724
    %v752 = vpack.c.bf16 %v730, %v728
    %v755 = vunpack.c.l.b16 %v751
    %v756 = vunpack.c.h.b16 %v751
    %v757 = vunpack.c.l.b16 %v752
    %v758 = vunpack.c.h.b16 %v752
    %v759 = vpack.c.b16 %v755, %v755
    %v760 = vpack.c.b16 %v756, %v756
    %v761 = vpack.c.b16 %v757, %v757
    %v762 = vpack.c.b16 %v758, %v758
    %767 = vst [vmem:[#allocation3 + $0x10] sm:$0xf] %v759
    %768 = vst [vmem:[#allocation3 + $0x14] sm:$0xf] %v760
    %769 = vst [vmem:[#allocation3 + $0x18] sm:$0xf] %v761
    %770 = vst [vmem:[#allocation3 + $0x1c] sm:$0xf] %v762
    %v771 = vld [vmem:[#allocation3] sm:$0xf]
    %v772 = vld [vmem:[#allocation3 + $0x4] sm:$0xf]
    %v773 = vld [vmem:[#allocation3 + $0x8] sm:$0xf]
    %v774 = vld [vmem:[#allocation3 + $0xc] sm:$0xf]
    %v775 = vld [vmem:[#allocation3 + $0x10] sm:$0xf]
    %v776 = vld [vmem:[#allocation3 + $0x14] sm:$0xf]
    %v777 = vld [vmem:[#allocation3 + $0x18] sm:$0xf]
    %v778 = vld [vmem:[#allocation3 + $0x1c] sm:$0xf]
    %v779 = vld [vmem:[#allocation6 + $0x300] sm:$0xff]
    %v780 = vld [vmem:[#allocation6 + $0x310] sm:$0xff]
    %v781 = vld [vmem:[#allocation6 + $0x320] sm:$0xff]
    %v782 = vld [vmem:[#allocation6 + $0x330] sm:$0xff]
    %v783 = vld [vmem:[#allocation6 + $0x340] sm:$0xff]
    %v784 = vld [vmem:[#allocation6 + $0x350] sm:$0xff]
    %v785 = vld [vmem:[#allocation6 + $0x360] sm:$0xff]
    %v786 = vld [vmem:[#allocation6 + $0x370] sm:$0xff]
    %v787 = vld [vmem:[#allocation6 + $0x380] sm:$0xff]
    %v788 = vld [vmem:[#allocation6 + $0x390] sm:$0xff]
    %v789 = vld [vmem:[#allocation6 + $0x3a0] sm:$0xff]
    %v790 = vld [vmem:[#allocation6 + $0x3b0] sm:$0xff]
    %v791 = vld [vmem:[#allocation6 + $0x3c0] sm:$0xff]
    %v792 = vld [vmem:[#allocation6 + $0x3d0] sm:$0xff]
    %v793 = vld [vmem:[#allocation6 + $0x3e0] sm:$0xff]
    %v794 = vld [vmem:[#allocation6 + $0x3f0] sm:$0xff]
    %s795 = scalar_lea.vmem [#allocation8], 2
    %v796 = vld [vmem:[%s795] ss:$8 sm:$0x3]
    %v798 = vlaneseq
    %v799 = vshrl.u32 %v798, 7
    %v800 = vsub.s32 0, %v799
    %v801 = vrot.slane %v796, %v800
    %v802 = vlaneseq
    %v803 = vshrl.u32 %v802, 7
    %v804 = vsub.s32 1, %v803
    %v805 = vrot.slane %v796, %v804
    %v816 = vunpack.c.l.b16 %v771
    %v817 = vunpack.c.l.b16 %v772
    %v818 = vunpack.c.l.b16 %v773
    %v819 = vunpack.c.l.b16 %v774
    %v820 = vunpack.c.l.b16 %v775
    %v821 = vunpack.c.l.b16 %v776
    %v822 = vunpack.c.l.b16 %v777
    %v823 = vunpack.c.l.b16 %v778
    %v824 = vpack.c.b16 %v817, %v816
    %v825 = vpack.c.b16 %v819, %v818
    %v826 = vpack.c.b16 %v821, %v820
    %v827 = vpack.c.b16 %v823, %v822
    %v848 = vunpack.c.l.b16 %v779
    %v849 = vunpack.c.h.b16 %v779
    %v850 = vunpack.c.l.b16 %v780
    %v851 = vunpack.c.h.b16 %v780
    %v852 = vunpack.c.l.b16 %v781
    %v853 = vunpack.c.h.b16 %v781
    %v854 = vunpack.c.l.b16 %v782
    %v855 = vunpack.c.h.b16 %v782
    %v856 = vunpack.c.l.b16 %v783
    %v857 = vunpack.c.h.b16 %v783
    %v858 = vunpack.c.l.b16 %v784
    %v859 = vunpack.c.h.b16 %v784
    %v860 = vunpack.c.l.b16 %v785
    %v861 = vunpack.c.h.b16 %v785
    %v862 = vunpack.c.l.b16 %v786
    %v863 = vunpack.c.h.b16 %v786
    %v864 = vunpack.c.l.b16 %v787
    %v865 = vunpack.c.h.b16 %v787
    %v866 = vunpack.c.l.b16 %v788
    %v867 = vunpack.c.h.b16 %v788
    %v868 = vunpack.c.l.b16 %v789
    %v869 = vunpack.c.h.b16 %v789
    %v870 = vunpack.c.l.b16 %v790
    %v871 = vunpack.c.h.b16 %v790
    %v872 = vunpack.c.l.b16 %v791
    %v873 = vunpack.c.h.b16 %v791
    %v874 = vunpack.c.l.b16 %v792
    %v875 = vunpack.c.h.b16 %v792
    %v876 = vunpack.c.l.b16 %v793
    %v877 = vunpack.c.h.b16 %v793
    %v878 = vunpack.c.l.b16 %v794
    %v879 = vunpack.c.h.b16 %v794
    %v880 = vpack.c.b16 %v850, %v848
    %v881 = vpack.c.b16 %v851, %v849
    %v882 = vpack.c.b16 %v854, %v852
    %v883 = vpack.c.b16 %v855, %v853
    %v884 = vpack.c.b16 %v858, %v856
    %v885 = vpack.c.b16 %v859, %v857
    %v886 = vpack.c.b16 %v862, %v860
    %v887 = vpack.c.b16 %v863, %v861
    %v888 = vpack.c.b16 %v866, %v864
    %v889 = vpack.c.b16 %v867, %v865
    %v890 = vpack.c.b16 %v870, %v868
    %v891 = vpack.c.b16 %v871, %v869
    %v892 = vpack.c.b16 %v874, %v872
    %v893 = vpack.c.b16 %v875, %v873
    %v894 = vpack.c.b16 %v878, %v876
    %v895 = vpack.c.b16 %v879, %v877
    %912 = vmatprep.subr.bf16.mxu0 %v895
    %913 = vmatpush1.bf16.msra.mxu0 %v894
    %914 = vmatprep.subr.bf16.mxu0 %v893
    %915 = vmatpush1.bf16.msra.mxu0 %v892
    %916 = vmatprep.subr.bf16.mxu0 %v891
    %917 = vmatpush1.bf16.msra.mxu0 %v890
    %918 = vmatprep.subr.bf16.mxu0 %v889
    %919 = vmatpush1.bf16.msra.mxu0 %v888
    %920 = vmatprep.subr.bf16.mxu0 %v887
    %921 = vmatpush1.bf16.msra.mxu0 %v886
    %922 = vmatprep.subr.bf16.mxu0 %v885
    %923 = vmatpush1.bf16.msra.mxu0 %v884
    %924 = vmatprep.subr.bf16.mxu0 %v883
    %925 = vmatpush1.bf16.msra.mxu0 %v882
    %926 = vmatprep.subr.bf16.mxu0 %v881
    %927 = vmatpush1.bf16.msra.mxu0 %v880
    %928 = vmatprep.subr.bf16.mxu0 0
    %929 = vmatpush2.bf16.msra.mxu0 0
    %930 = vmatprep.subr.bf16.mxu0 0
    %931 = vmatpush2.bf16.msra.mxu0 0
    %932 = vmatprep.subr.bf16.mxu0 0
    %933 = vmatpush2.bf16.msra.mxu0 0
    %934 = vmatprep.subr.bf16.mxu0 0
    %935 = vmatpush2.bf16.msra.mxu0 0
    %936 = vmatprep.subr.bf16.mxu0 0
    %937 = vmatpush2.bf16.msra.mxu0 0
    %938 = vmatprep.subr.bf16.mxu0 0
    %939 = vmatpush2.bf16.msra.mxu0 0
    %940 = vmatprep.subr.bf16.mxu0 0
    %941 = vmatpush2.bf16.msra.mxu0 0
    %942 = vmatprep.subr.bf16.mxu0 0
    %943 = vmatpush2.bf16.msra.mxu0 0
    %944 = vmatprep.mubr.bf16.mxu0 0
    %945 = vmatmul.mubr.bf16.gmra.mxu0 %v824
    %v946 = vpop.f32.mrf.mxu0
    %v947 = vadd.f32 %v801, %v946
    %v948 = vpop.f32.mrf.mxu0
    %v949 = vadd.f32 %v805, %v948
    %v950 = vpop.f32.mrf.mxu0
    %v951 = vadd.f32 %v801, %v950
    %v952 = vpop.f32.mrf.mxu0
    %v953 = vadd.f32 %v805, %v952
    %954 = vmatprep.mubr.bf16.mxu0 0
    %955 = vmatmul.mubr.bf16.gmra.mxu0 %v825
    %v956 = vpop.f32.mrf.mxu0
    %v957 = vadd.f32 %v801, %v956
    %v958 = vpop.f32.mrf.mxu0
    %v959 = vadd.f32 %v805, %v958
    %v960 = vpop.f32.mrf.mxu0
    %v961 = vadd.f32 %v801, %v960
    %v962 = vpop.f32.mrf.mxu0
    %v963 = vadd.f32 %v805, %v962
    %964 = vmatprep.mubr.bf16.mxu0 0
    %965 = vmatmul.mubr.bf16.gmra.mxu0 %v826
    %v966 = vpop.f32.mrf.mxu0
    %v967 = vadd.f32 %v801, %v966
    %v968 = vpop.f32.mrf.mxu0
    %v969 = vadd.f32 %v805, %v968
    %v970 = vpop.f32.mrf.mxu0
    %v971 = vadd.f32 %v801, %v970
    %v972 = vpop.f32.mrf.mxu0
    %v973 = vadd.f32 %v805, %v972
    %974 = vmatprep.mubr.bf16.mxu0 0
    %975 = vmatmul.mubr.bf16.gmra.mxu0 %v827
    %v976 = vpop.f32.mrf.mxu0
    %v977 = vadd.f32 %v801, %v976
    %v978 = vpop.f32.mrf.mxu0
    %v979 = vadd.f32 %v805, %v978
    %v980 = vpop.f32.mrf.mxu0
    %v981 = vadd.f32 %v801, %v980
    %v982 = vpop.f32.mrf.mxu0
    %v983 = vadd.f32 %v805, %v982
    %984 = vdwg.mxu0
    %v985 = vmax.f32 %v947, 0.0
    %v986 = vmax.f32 %v949, 0.0
    %v987 = vmax.f32 %v951, 0.0
    %v988 = vmax.f32 %v953, 0.0
    %v989 = vmax.f32 %v957, 0.0
    %v990 = vmax.f32 %v959, 0.0
    %v991 = vmax.f32 %v961, 0.0
    %v992 = vmax.f32 %v963, 0.0
    %v993 = vmax.f32 %v967, 0.0
    %v994 = vmax.f32 %v969, 0.0
    %v995 = vmax.f32 %v971, 0.0
    %v996 = vmax.f32 %v973, 0.0
    %v997 = vmax.f32 %v977, 0.0
    %v998 = vmax.f32 %v979, 0.0
    %v999 = vmax.f32 %v981, 0.0
    %v1000 = vmax.f32 %v983, 0.0
    %v1001 = vpack.c.bf16 %v987, %v985
    %v1002 = vpack.c.bf16 %v988, %v986
    %v1003 = vpack.c.bf16 %v991, %v989
    %v1004 = vpack.c.bf16 %v992, %v990
    %v1005 = vpack.c.bf16 %v995, %v993
    %v1006 = vpack.c.bf16 %v996, %v994
    %v1007 = vpack.c.bf16 %v999, %v997
    %v1008 = vpack.c.bf16 %v1000, %v998
    %v1017 = vunpack.c.l.b16 %v1001
    %v1018 = vunpack.c.l.b16 %v1002
    %v1019 = vunpack.c.h.b16 %v1001
    %v1020 = vunpack.c.h.b16 %v1002
    %v1021 = vunpack.c.l.b16 %v1003
    %v1022 = vunpack.c.l.b16 %v1004
    %v1023 = vunpack.c.h.b16 %v1003
    %v1024 = vunpack.c.h.b16 %v1004
    %v1025 = vunpack.c.l.b16 %v1005
    %v1026 = vunpack.c.l.b16 %v1006
    %v1027 = vunpack.c.h.b16 %v1005
    %v1028 = vunpack.c.h.b16 %v1006
    %v1029 = vunpack.c.l.b16 %v1007
    %v1030 = vunpack.c.l.b16 %v1008
    %v1031 = vunpack.c.h.b16 %v1007
    %v1032 = vunpack.c.h.b16 %v1008
    %v1033 = vpack.c.b16 %v1018, %v1017
    %v1034 = vpack.c.b16 %v1020, %v1019
    %v1035 = vpack.c.b16 %v1022, %v1021
    %v1036 = vpack.c.b16 %v1024, %v1023
    %v1037 = vpack.c.b16 %v1026, %v1025
    %v1038 = vpack.c.b16 %v1028, %v1027
    %v1039 = vpack.c.b16 %v1030, %v1029
    %v1040 = vpack.c.b16 %v1032, %v1031
    %1049 = vst [vmem:[#allocation4] sm:$0xff] %v1033
    %1050 = vst [vmem:[#allocation4 + $0x8] sm:$0xff] %v1034
    %1051 = vst [vmem:[#allocation4 + $0x10] sm:$0xff] %v1035
    %1052 = vst [vmem:[#allocation4 + $0x18] sm:$0xff] %v1036
    %1053 = vst [vmem:[#allocation4 + $0x20] sm:$0xff] %v1037
    %1054 = vst [vmem:[#allocation4 + $0x28] sm:$0xff] %v1038
    %1055 = vst [vmem:[#allocation4 + $0x30] sm:$0xff] %v1039
    %1056 = vst [vmem:[#allocation4 + $0x38] sm:$0xff] %v1040
    %v1057 = vld [vmem:[#allocation4] sm:$0xff]
    %v1058 = vld [vmem:[#allocation4 + $0x8] sm:$0xff]
    %v1059 = vld [vmem:[#allocation4 + $0x10] sm:$0xff]
    %v1060 = vld [vmem:[#allocation4 + $0x18] sm:$0xff]
    %v1061 = vld [vmem:[#allocation4 + $0x20] sm:$0xff]
    %v1062 = vld [vmem:[#allocation4 + $0x28] sm:$0xff]
    %v1063 = vld [vmem:[#allocation4 + $0x30] sm:$0xff]
    %v1064 = vld [vmem:[#allocation4 + $0x38] sm:$0xff]
    %v1065 = vld [vmem:[#allocation6 + $0x400] sm:$0xff]
    %v1066 = vld [vmem:[#allocation6 + $0x408] sm:$0xff]
    %v1067 = vld [vmem:[#allocation6 + $0x410] sm:$0xff]
    %v1068 = vld [vmem:[#allocation6 + $0x418] sm:$0xff]
    %v1069 = vld [vmem:[#allocation6 + $0x420] sm:$0xff]
    %v1070 = vld [vmem:[#allocation6 + $0x428] sm:$0xff]
    %v1071 = vld [vmem:[#allocation6 + $0x430] sm:$0xff]
    %v1072 = vld [vmem:[#allocation6 + $0x438] sm:$0xff]
    %v1073 = vld [vmem:[#allocation6 + $0x440] sm:$0xff]
    %v1074 = vld [vmem:[#allocation6 + $0x448] sm:$0xff]
    %v1075 = vld [vmem:[#allocation6 + $0x450] sm:$0xff]
    %v1076 = vld [vmem:[#allocation6 + $0x458] sm:$0xff]
    %v1077 = vld [vmem:[#allocation6 + $0x460] sm:$0xff]
    %v1078 = vld [vmem:[#allocation6 + $0x468] sm:$0xff]
    %v1079 = vld [vmem:[#allocation6 + $0x470] sm:$0xff]
    %v1080 = vld [vmem:[#allocation6 + $0x478] sm:$0xff]
    %v1081 = vld [vmem:[#allocation6 + $0x480] sm:$0xff]
    %v1082 = vld [vmem:[#allocation6 + $0x488] sm:$0xff]
    %v1083 = vld [vmem:[#allocation6 + $0x490] sm:$0xff]
    %v1084 = vld [vmem:[#allocation6 + $0x498] sm:$0xff]
    %v1085 = vld [vmem:[#allocation6 + $0x4a0] sm:$0xff]
    %v1086 = vld [vmem:[#allocation6 + $0x4a8] sm:$0xff]
    %v1087 = vld [vmem:[#allocation6 + $0x4b0] sm:$0xff]
    %v1088 = vld [vmem:[#allocation6 + $0x4b8] sm:$0xff]
    %v1089 = vld [vmem:[#allocation6 + $0x4c0] sm:$0xff]
    %v1090 = vld [vmem:[#allocation6 + $0x4c8] sm:$0xff]
    %v1091 = vld [vmem:[#allocation6 + $0x4d0] sm:$0xff]
    %v1092 = vld [vmem:[#allocation6 + $0x4d8] sm:$0xff]
    %v1093 = vld [vmem:[#allocation6 + $0x4e0] sm:$0xff]
    %v1094 = vld [vmem:[#allocation6 + $0x4e8] sm:$0xff]
    %v1095 = vld [vmem:[#allocation6 + $0x4f0] sm:$0xff]
    %v1096 = vld [vmem:[#allocation6 + $0x4f8] sm:$0xff]
    %v1097 = vld [vmem:[#allocation6 + $0x500] sm:$0xff]
    %v1098 = vld [vmem:[#allocation6 + $0x508] sm:$0xff]
    %v1099 = vld [vmem:[#allocation6 + $0x510] sm:$0xff]
    %v1100 = vld [vmem:[#allocation6 + $0x518] sm:$0xff]
    %v1101 = vld [vmem:[#allocation6 + $0x520] sm:$0xff]
    %v1102 = vld [vmem:[#allocation6 + $0x528] sm:$0xff]
    %v1103 = vld [vmem:[#allocation6 + $0x530] sm:$0xff]
    %v1104 = vld [vmem:[#allocation6 + $0x538] sm:$0xff]
    %v1105 = vld [vmem:[#allocation6 + $0x540] sm:$0xff]
    %v1106 = vld [vmem:[#allocation6 + $0x548] sm:$0xff]
    %v1107 = vld [vmem:[#allocation6 + $0x550] sm:$0xff]
    %v1108 = vld [vmem:[#allocation6 + $0x558] sm:$0xff]
    %v1109 = vld [vmem:[#allocation6 + $0x560] sm:$0xff]
    %v1110 = vld [vmem:[#allocation6 + $0x568] sm:$0xff]
    %v1111 = vld [vmem:[#allocation6 + $0x570] sm:$0xff]
    %v1112 = vld [vmem:[#allocation6 + $0x578] sm:$0xff]
    %v1113 = vld [vmem:[#allocation6 + $0x580] sm:$0xff]
    %v1114 = vld [vmem:[#allocation6 + $0x588] sm:$0xff]
    %v1115 = vld [vmem:[#allocation6 + $0x590] sm:$0xff]
    %v1116 = vld [vmem:[#allocation6 + $0x598] sm:$0xff]
    %v1117 = vld [vmem:[#allocation6 + $0x5a0] sm:$0xff]
    %v1118 = vld [vmem:[#allocation6 + $0x5a8] sm:$0xff]
    %v1119 = vld [vmem:[#allocation6 + $0x5b0] sm:$0xff]
    %v1120 = vld [vmem:[#allocation6 + $0x5b8] sm:$0xff]
    %v1121 = vld [vmem:[#allocation6 + $0x5c0] sm:$0xff]
    %v1122 = vld [vmem:[#allocation6 + $0x5c8] sm:$0xff]
    %v1123 = vld [vmem:[#allocation6 + $0x5d0] sm:$0xff]
    %v1124 = vld [vmem:[#allocation6 + $0x5d8] sm:$0xff]
    %v1125 = vld [vmem:[#allocation6 + $0x5e0] sm:$0xff]
    %v1126 = vld [vmem:[#allocation6 + $0x5e8] sm:$0xff]
    %v1127 = vld [vmem:[#allocation6 + $0x5f0] sm:$0xff]
    %v1128 = vld [vmem:[#allocation6 + $0x5f8] sm:$0xff]
    %s1129 = scalar_lea.vmem [#allocation8], 3
    %v1130 = vld [vmem:[%s1129] ss:$8 sm:$0xf]
    %v1132 = vlaneseq
    %v1133 = vshrl.u32 %v1132, 7
    %v1134 = vsub.s32 0, %v1133
    %v1135 = vrot.slane %v1130, %v1134
    %v1136 = vlaneseq
    %v1137 = vshrl.u32 %v1136, 7
    %v1138 = vsub.s32 1, %v1137
    %v1139 = vrot.slane %v1130, %v1138
    %v1140 = vlaneseq
    %v1141 = vshrl.u32 %v1140, 7
    %v1142 = vsub.s32 2, %v1141
    %v1143 = vrot.slane %v1130, %v1142
    %v1144 = vlaneseq
    %v1145 = vshrl.u32 %v1144, 7
    %v1146 = vsub.s32 3, %v1145
    %v1147 = vrot.slane %v1130, %v1146
    %v1160 = vunpack.c.l.b16 %v1057
    %v1161 = vunpack.c.h.b16 %v1057
    %v1162 = vunpack.c.l.b16 %v1058
    %v1163 = vunpack.c.h.b16 %v1058
    %v1164 = vunpack.c.l.b16 %v1059
    %v1165 = vunpack.c.h.b16 %v1059
    %v1166 = vunpack.c.l.b16 %v1060
    %v1167 = vunpack.c.h.b16 %v1060
    %v1168 = vunpack.c.l.b16 %v1061
    %v1169 = vunpack.c.h.b16 %v1061
    %v1170 = vunpack.c.l.b16 %v1062
    %v1171 = vunpack.c.h.b16 %v1062
    %v1172 = vunpack.c.l.b16 %v1063
    %v1173 = vunpack.c.h.b16 %v1063
    %v1174 = vunpack.c.l.b16 %v1064
    %v1175 = vunpack.c.h.b16 %v1064
    %v1176 = vpack.c.b16 %v1162, %v1160
    %v1177 = vpack.c.b16 %v1163, %v1161
    %v1178 = vpack.c.b16 %v1166, %v1164
    %v1179 = vpack.c.b16 %v1167, %v1165
    %v1180 = vpack.c.b16 %v1170, %v1168
    %v1181 = vpack.c.b16 %v1171, %v1169
    %v1182 = vpack.c.b16 %v1174, %v1172
    %v1183 = vpack.c.b16 %v1175, %v1173
    %v1256 = vunpack.c.l.b16 %v1065
    %v1257 = vunpack.c.h.b16 %v1065
    %v1258 = vunpack.c.l.b16 %v1066
    %v1259 = vunpack.c.h.b16 %v1066
    %v1260 = vunpack.c.l.b16 %v1067
    %v1261 = vunpack.c.h.b16 %v1067
    %v1262 = vunpack.c.l.b16 %v1068
    %v1263 = vunpack.c.h.b16 %v1068
    %v1264 = vunpack.c.l.b16 %v1069
    %v1265 = vunpack.c.h.b16 %v1069
    %v1266 = vunpack.c.l.b16 %v1070
    %v1267 = vunpack.c.h.b16 %v1070
    %v1268 = vunpack.c.l.b16 %v1071
    %v1269 = vunpack.c.h.b16 %v1071
    %v1270 = vunpack.c.l.b16 %v1072
    %v1271 = vunpack.c.h.b16 %v1072
    %v1272 = vunpack.c.l.b16 %v1073
    %v1273 = vunpack.c.h.b16 %v1073
    %v1274 = vunpack.c.l.b16 %v1074
    %v1275 = vunpack.c.h.b16 %v1074
    %v1276 = vunpack.c.l.b16 %v1075
    %v1277 = vunpack.c.h.b16 %v1075
    %v1278 = vunpack.c.l.b16 %v1076
    %v1279 = vunpack.c.h.b16 %v1076
    %v1280 = vunpack.c.l.b16 %v1077
    %v1281 = vunpack.c.h.b16 %v1077
    %v1282 = vunpack.c.l.b16 %v1078
    %v1283 = vunpack.c.h.b16 %v1078
    %v1284 = vunpack.c.l.b16 %v1079
    %v1285 = vunpack.c.h.b16 %v1079
    %v1286 = vunpack.c.l.b16 %v1080
    %v1287 = vunpack.c.h.b16 %v1080
    %v1288 = vunpack.c.l.b16 %v1081
    %v1289 = vunpack.c.h.b16 %v1081
    %v1290 = vunpack.c.l.b16 %v1082
    %v1291 = vunpack.c.h.b16 %v1082
    %v1292 = vunpack.c.l.b16 %v1083
    %v1293 = vunpack.c.h.b16 %v1083
    %v1294 = vunpack.c.l.b16 %v1084
    %v1295 = vunpack.c.h.b16 %v1084
    %v1296 = vunpack.c.l.b16 %v1085
    %v1297 = vunpack.c.h.b16 %v1085
    %v1298 = vunpack.c.l.b16 %v1086
    %v1299 = vunpack.c.h.b16 %v1086
    %v1300 = vunpack.c.l.b16 %v1087
    %v1301 = vunpack.c.h.b16 %v1087
    %v1302 = vunpack.c.l.b16 %v1088
    %v1303 = vunpack.c.h.b16 %v1088
    %v1304 = vunpack.c.l.b16 %v1089
    %v1305 = vunpack.c.h.b16 %v1089
    %v1306 = vunpack.c.l.b16 %v1090
    %v1307 = vunpack.c.h.b16 %v1090
    %v1308 = vunpack.c.l.b16 %v1091
    %v1309 = vunpack.c.h.b16 %v1091
    %v1310 = vunpack.c.l.b16 %v1092
    %v1311 = vunpack.c.h.b16 %v1092
    %v1312 = vunpack.c.l.b16 %v1093
    %v1313 = vunpack.c.h.b16 %v1093
    %v1314 = vunpack.c.l.b16 %v1094
    %v1315 = vunpack.c.h.b16 %v1094
    %v1316 = vunpack.c.l.b16 %v1095
    %v1317 = vunpack.c.h.b16 %v1095
    %v1318 = vunpack.c.l.b16 %v1096
    %v1319 = vunpack.c.h.b16 %v1096
    %v1320 = vunpack.c.l.b16 %v1097
    %v1321 = vunpack.c.h.b16 %v1097
    %v1322 = vunpack.c.l.b16 %v1098
    %v1323 = vunpack.c.h.b16 %v1098
    %v1324 = vunpack.c.l.b16 %v1099
    %v1325 = vunpack.c.h.b16 %v1099
    %v1326 = vunpack.c.l.b16 %v1100
    %v1327 = vunpack.c.h.b16 %v1100
    %v1328 = vunpack.c.l.b16 %v1101
    %v1329 = vunpack.c.h.b16 %v1101
    %v1330 = vunpack.c.l.b16 %v1102
    %v1331 = vunpack.c.h.b16 %v1102
    %v1332 = vunpack.c.l.b16 %v1103
    %v1333 = vunpack.c.h.b16 %v1103
    %v1334 = vunpack.c.l.b16 %v1104
    %v1335 = vunpack.c.h.b16 %v1104
    %v1336 = vunpack.c.l.b16 %v1105
    %v1337 = vunpack.c.h.b16 %v1105
    %v1338 = vunpack.c.l.b16 %v1106
    %v1339 = vunpack.c.h.b16 %v1106
    %v1340 = vunpack.c.l.b16 %v1107
    %v1341 = vunpack.c.h.b16 %v1107
    %v1342 = vunpack.c.l.b16 %v1108
    %v1343 = vunpack.c.h.b16 %v1108
    %v1344 = vunpack.c.l.b16 %v1109
    %v1345 = vunpack.c.h.b16 %v1109
    %v1346 = vunpack.c.l.b16 %v1110
    %v1347 = vunpack.c.h.b16 %v1110
    %v1348 = vunpack.c.l.b16 %v1111
    %v1349 = vunpack.c.h.b16 %v1111
    %v1350 = vunpack.c.l.b16 %v1112
    %v1351 = vunpack.c.h.b16 %v1112
    %v1352 = vunpack.c.l.b16 %v1113
    %v1353 = vunpack.c.h.b16 %v1113
    %v1354 = vunpack.c.l.b16 %v1114
    %v1355 = vunpack.c.h.b16 %v1114
    %v1356 = vunpack.c.l.b16 %v1115
    %v1357 = vunpack.c.h.b16 %v1115
    %v1358 = vunpack.c.l.b16 %v1116
    %v1359 = vunpack.c.h.b16 %v1116
    %v1360 = vunpack.c.l.b16 %v1117
    %v1361 = vunpack.c.h.b16 %v1117
    %v1362 = vunpack.c.l.b16 %v1118
    %v1363 = vunpack.c.h.b16 %v1118
    %v1364 = vunpack.c.l.b16 %v1119
    %v1365 = vunpack.c.h.b16 %v1119
    %v1366 = vunpack.c.l.b16 %v1120
    %v1367 = vunpack.c.h.b16 %v1120
    %v1368 = vunpack.c.l.b16 %v1121
    %v1369 = vunpack.c.h.b16 %v1121
    %v1370 = vunpack.c.l.b16 %v1122
    %v1371 = vunpack.c.h.b16 %v1122
    %v1372 = vunpack.c.l.b16 %v1123
    %v1373 = vunpack.c.h.b16 %v1123
    %v1374 = vunpack.c.l.b16 %v1124
    %v1375 = vunpack.c.h.b16 %v1124
    %v1376 = vunpack.c.l.b16 %v1125
    %v1377 = vunpack.c.h.b16 %v1125
    %v1378 = vunpack.c.l.b16 %v1126
    %v1379 = vunpack.c.h.b16 %v1126
    %v1380 = vunpack.c.l.b16 %v1127
    %v1381 = vunpack.c.h.b16 %v1127
    %v1382 = vunpack.c.l.b16 %v1128
    %v1383 = vunpack.c.h.b16 %v1128
    %v1384 = vpack.c.b16 %v1260, %v1256
    %v1385 = vpack.c.b16 %v1261, %v1257
    %v1386 = vpack.c.b16 %v1262, %v1258
    %v1387 = vpack.c.b16 %v1263, %v1259
    %v1388 = vpack.c.b16 %v1268, %v1264
    %v1389 = vpack.c.b16 %v1269, %v1265
    %v1390 = vpack.c.b16 %v1270, %v1266
    %v1391 = vpack.c.b16 %v1271, %v1267
    %v1392 = vpack.c.b16 %v1276, %v1272
    %v1393 = vpack.c.b16 %v1277, %v1273
    %v1394 = vpack.c.b16 %v1278, %v1274
    %v1395 = vpack.c.b16 %v1279, %v1275
    %v1396 = vpack.c.b16 %v1284, %v1280
    %v1397 = vpack.c.b16 %v1285, %v1281
    %v1398 = vpack.c.b16 %v1286, %v1282
    %v1399 = vpack.c.b16 %v1287, %v1283
    %v1400 = vpack.c.b16 %v1292, %v1288
    %v1401 = vpack.c.b16 %v1293, %v1289
    %v1402 = vpack.c.b16 %v1294, %v1290
    %v1403 = vpack.c.b16 %v1295, %v1291
    %v1404 = vpack.c.b16 %v1300, %v1296
    %v1405 = vpack.c.b16 %v1301, %v1297
    %v1406 = vpack.c.b16 %v1302, %v1298
    %v1407 = vpack.c.b16 %v1303, %v1299
    %v1408 = vpack.c.b16 %v1308, %v1304
    %v1409 = vpack.c.b16 %v1309, %v1305
    %v1410 = vpack.c.b16 %v1310, %v1306
    %v1411 = vpack.c.b16 %v1311, %v1307
    %v1412 = vpack.c.b16 %v1316, %v1312
    %v1413 = vpack.c.b16 %v1317, %v1313
    %v1414 = vpack.c.b16 %v1318, %v1314
    %v1415 = vpack.c.b16 %v1319, %v1315
    %v1416 = vpack.c.b16 %v1324, %v1320
    %v1417 = vpack.c.b16 %v1325, %v1321
    %v1418 = vpack.c.b16 %v1326, %v1322
    %v1419 = vpack.c.b16 %v1327, %v1323
    %v1420 = vpack.c.b16 %v1332, %v1328
    %v1421 = vpack.c.b16 %v1333, %v1329
    %v1422 = vpack.c.b16 %v1334, %v1330
    %v1423 = vpack.c.b16 %v1335, %v1331
    %v1424 = vpack.c.b16 %v1340, %v1336
    %v1425 = vpack.c.b16 %v1341, %v1337
    %v1426 = vpack.c.b16 %v1342, %v1338
    %v1427 = vpack.c.b16 %v1343, %v1339
    %v1428 = vpack.c.b16 %v1348, %v1344
    %v1429 = vpack.c.b16 %v1349, %v1345
    %v1430 = vpack.c.b16 %v1350, %v1346
    %v1431 = vpack.c.b16 %v1351, %v1347
    %v1432 = vpack.c.b16 %v1356, %v1352
    %v1433 = vpack.c.b16 %v1357, %v1353
    %v1434 = vpack.c.b16 %v1358, %v1354
    %v1435 = vpack.c.b16 %v1359, %v1355
    %v1436 = vpack.c.b16 %v1364, %v1360
    %v1437 = vpack.c.b16 %v1365, %v1361
    %v1438 = vpack.c.b16 %v1366, %v1362
    %v1439 = vpack.c.b16 %v1367, %v1363
    %v1440 = vpack.c.b16 %v1372, %v1368
    %v1441 = vpack.c.b16 %v1373, %v1369
    %v1442 = vpack.c.b16 %v1374, %v1370
    %v1443 = vpack.c.b16 %v1375, %v1371
    %v1444 = vpack.c.b16 %v1380, %v1376
    %v1445 = vpack.c.b16 %v1381, %v1377
    %v1446 = vpack.c.b16 %v1382, %v1378
    %v1447 = vpack.c.b16 %v1383, %v1379
    %1512 = vmatprep.subr.bf16.mxu0 %v1413
    %1513 = vmatpush1.bf16.msra.mxu0 %v1412
    %1514 = vmatprep.subr.bf16.mxu0 %v1409
    %1515 = vmatpush1.bf16.msra.mxu0 %v1408
    %1516 = vmatprep.subr.bf16.mxu0 %v1405
    %1517 = vmatpush1.bf16.msra.mxu0 %v1404
    %1518 = vmatprep.subr.bf16.mxu0 %v1401
    %1519 = vmatpush1.bf16.msra.mxu0 %v1400
    %1520 = vmatprep.subr.bf16.mxu0 %v1397
    %1521 = vmatpush1.bf16.msra.mxu0 %v1396
    %1522 = vmatprep.subr.bf16.mxu0 %v1393
    %1523 = vmatpush1.bf16.msra.mxu0 %v1392
    %1524 = vmatprep.subr.bf16.mxu0 %v1389
    %1525 = vmatpush1.bf16.msra.mxu0 %v1388
    %1526 = vmatprep.subr.bf16.mxu0 %v1385
    %1527 = vmatpush1.bf16.msra.mxu0 %v1384
    %1528 = vmatprep.subr.bf16.mxu0 %v1445
    %1529 = vmatpush2.bf16.msra.mxu0 %v1444
    %1530 = vmatprep.subr.bf16.mxu0 %v1441
    %1531 = vmatpush2.bf16.msra.mxu0 %v1440
    %1532 = vmatprep.subr.bf16.mxu0 %v1437
    %1533 = vmatpush2.bf16.msra.mxu0 %v1436
    %1534 = vmatprep.subr.bf16.mxu0 %v1433
    %1535 = vmatpush2.bf16.msra.mxu0 %v1432
    %1536 = vmatprep.subr.bf16.mxu0 %v1429
    %1537 = vmatpush2.bf16.msra.mxu0 %v1428
    %1538 = vmatprep.subr.bf16.mxu0 %v1425
    %1539 = vmatpush2.bf16.msra.mxu0 %v1424
    %1540 = vmatprep.subr.bf16.mxu0 %v1421
    %1541 = vmatpush2.bf16.msra.mxu0 %v1420
    %1542 = vmatprep.subr.bf16.mxu0 %v1417
    %1543 = vmatpush2.bf16.msra.mxu0 %v1416
    %1544 = vmatprep.mubr.bf16.mxu0 %v1177
    %1545 = vmatmul.mubr.bf16.gmra.mxu0 %v1176
    %v1546 = vpop.f32.mrf.mxu0
    %v1547 = vadd.f32 %v1135, %v1546
    %v1548 = vpop.f32.mrf.mxu0
    %v1549 = vadd.f32 %v1139, %v1548
    %v1550 = vpop.f32.mrf.mxu0
    %v1551 = vadd.f32 %v1135, %v1550
    %v1552 = vpop.f32.mrf.mxu0
    %v1553 = vadd.f32 %v1139, %v1552
    %1554 = vmatprep.mubr.bf16.mxu0 %v1179
    %1555 = vmatmul.mubr.bf16.gmra.mxu0 %v1178
    %v1556 = vpop.f32.mrf.mxu0
    %v1557 = vadd.f32 %v1135, %v1556
    %v1558 = vpop.f32.mrf.mxu0
    %v1559 = vadd.f32 %v1139, %v1558
    %v1560 = vpop.f32.mrf.mxu0
    %v1561 = vadd.f32 %v1135, %v1560
    %v1562 = vpop.f32.mrf.mxu0
    %v1563 = vadd.f32 %v1139, %v1562
    %1564 = vmatprep.mubr.bf16.mxu0 %v1181
    %1565 = vmatmul.mubr.bf16.gmra.mxu0 %v1180
    %v1566 = vpop.f32.mrf.mxu0
    %v1567 = vadd.f32 %v1135, %v1566
    %v1568 = vpop.f32.mrf.mxu0
    %v1569 = vadd.f32 %v1139, %v1568
    %v1570 = vpop.f32.mrf.mxu0
    %v1571 = vadd.f32 %v1135, %v1570
    %v1572 = vpop.f32.mrf.mxu0
    %v1573 = vadd.f32 %v1139, %v1572
    %1574 = vmatprep.mubr.bf16.mxu0 %v1183
    %1575 = vmatmul.mubr.bf16.gmra.mxu0 %v1182
    %v1576 = vpop.f32.mrf.mxu0
    %v1577 = vadd.f32 %v1135, %v1576
    %v1578 = vpop.f32.mrf.mxu0
    %v1579 = vadd.f32 %v1139, %v1578
    %v1580 = vpop.f32.mrf.mxu0
    %v1581 = vadd.f32 %v1135, %v1580
    %v1582 = vpop.f32.mrf.mxu0
    %v1583 = vadd.f32 %v1139, %v1582
    %1584 = vdwg.mxu0
    %1585 = vmatprep.subr.bf16.mxu0 %v1415
    %1586 = vmatpush1.bf16.msra.mxu0 %v1414
    %1587 = vmatprep.subr.bf16.mxu0 %v1411
    %1588 = vmatpush1.bf16.msra.mxu0 %v1410
    %1589 = vmatprep.subr.bf16.mxu0 %v1407
    %1590 = vmatpush1.bf16.msra.mxu0 %v1406
    %1591 = vmatprep.subr.bf16.mxu0 %v1403
    %1592 = vmatpush1.bf16.msra.mxu0 %v1402
    %1593 = vmatprep.subr.bf16.mxu0 %v1399
    %1594 = vmatpush1.bf16.msra.mxu0 %v1398
    %1595 = vmatprep.subr.bf16.mxu0 %v1395
    %1596 = vmatpush1.bf16.msra.mxu0 %v1394
    %1597 = vmatprep.subr.bf16.mxu0 %v1391
    %1598 = vmatpush1.bf16.msra.mxu0 %v1390
    %1599 = vmatprep.subr.bf16.mxu0 %v1387
    %1600 = vmatpush1.bf16.msra.mxu0 %v1386
    %1601 = vmatprep.subr.bf16.mxu0 %v1447
    %1602 = vmatpush2.bf16.msra.mxu0 %v1446
    %1603 = vmatprep.subr.bf16.mxu0 %v1443
    %1604 = vmatpush2.bf16.msra.mxu0 %v1442
    %1605 = vmatprep.subr.bf16.mxu0 %v1439
    %1606 = vmatpush2.bf16.msra.mxu0 %v1438
    %1607 = vmatprep.subr.bf16.mxu0 %v1435
    %1608 = vmatpush2.bf16.msra.mxu0 %v1434
    %1609 = vmatprep.subr.bf16.mxu0 %v1431
    %1610 = vmatpush2.bf16.msra.mxu0 %v1430
    %1611 = vmatprep.subr.bf16.mxu0 %v1427
    %1612 = vmatpush2.bf16.msra.mxu0 %v1426
    %1613 = vmatprep.subr.bf16.mxu0 %v1423
    %1614 = vmatpush2.bf16.msra.mxu0 %v1422
    %1615 = vmatprep.subr.bf16.mxu0 %v1419
    %1616 = vmatpush2.bf16.msra.mxu0 %v1418
    %1617 = vmatprep.mubr.bf16.mxu0 %v1177
    %1618 = vmatmul.mubr.bf16.gmra.mxu0 %v1176
    %v1619 = vpop.f32.mrf.mxu0
    %v1620 = vadd.f32 %v1143, %v1619
    %v1621 = vpop.f32.mrf.mxu0
    %v1622 = vadd.f32 %v1147, %v1621
    %v1623 = vpop.f32.mrf.mxu0
    %v1624 = vadd.f32 %v1143, %v1623
    %v1625 = vpop.f32.mrf.mxu0
    %v1626 = vadd.f32 %v1147, %v1625
    %1627 = vmatprep.mubr.bf16.mxu0 %v1179
    %1628 = vmatmul.mubr.bf16.gmra.mxu0 %v1178
    %v1629 = vpop.f32.mrf.mxu0
    %v1630 = vadd.f32 %v1143, %v1629
    %v1631 = vpop.f32.mrf.mxu0
    %v1632 = vadd.f32 %v1147, %v1631
    %v1633 = vpop.f32.mrf.mxu0
    %v1634 = vadd.f32 %v1143, %v1633
    %v1635 = vpop.f32.mrf.mxu0
    %v1636 = vadd.f32 %v1147, %v1635
    %1637 = vmatprep.mubr.bf16.mxu0 %v1181
    %1638 = vmatmul.mubr.bf16.gmra.mxu0 %v1180
    %v1639 = vpop.f32.mrf.mxu0
    %v1640 = vadd.f32 %v1143, %v1639
    %v1641 = vpop.f32.mrf.mxu0
    %v1642 = vadd.f32 %v1147, %v1641
    %v1643 = vpop.f32.mrf.mxu0
    %v1644 = vadd.f32 %v1143, %v1643
    %v1645 = vpop.f32.mrf.mxu0
    %v1646 = vadd.f32 %v1147, %v1645
    %1647 = vmatprep.mubr.bf16.mxu0 %v1183
    %1648 = vmatmul.mubr.bf16.gmra.mxu0 %v1182
    %v1649 = vpop.f32.mrf.mxu0
    %v1650 = vadd.f32 %v1143, %v1649
    %v1651 = vpop.f32.mrf.mxu0
    %v1652 = vadd.f32 %v1147, %v1651
    %v1653 = vpop.f32.mrf.mxu0
    %v1654 = vadd.f32 %v1143, %v1653
    %v1655 = vpop.f32.mrf.mxu0
    %v1656 = vadd.f32 %v1147, %v1655
    %1657 = vdwg.mxu0
    %v1658 = vmax.f32 %v1547, 0.0
    %v1659 = vmax.f32 %v1549, 0.0
    %v1660 = vmax.f32 %v1620, 0.0
    %v1661 = vmax.f32 %v1622, 0.0
    %v1662 = vmax.f32 %v1551, 0.0
    %v1663 = vmax.f32 %v1553, 0.0
    %v1664 = vmax.f32 %v1624, 0.0
    %v1665 = vmax.f32 %v1626, 0.0
    %v1666 = vmax.f32 %v1557, 0.0
    %v1667 = vmax.f32 %v1559, 0.0
    %v1668 = vmax.f32 %v1630, 0.0
    %v1669 = vmax.f32 %v1632, 0.0
    %v1670 = vmax.f32 %v1561, 0.0
    %v1671 = vmax.f32 %v1563, 0.0
    %v1672 = vmax.f32 %v1634, 0.0
    %v1673 = vmax.f32 %v1636, 0.0
    %v1674 = vmax.f32 %v1567, 0.0
    %v1675 = vmax.f32 %v1569, 0.0
    %v1676 = vmax.f32 %v1640, 0.0
    %v1677 = vmax.f32 %v1642, 0.0
    %v1678 = vmax.f32 %v1571, 0.0
    %v1679 = vmax.f32 %v1573, 0.0
    %v1680 = vmax.f32 %v1644, 0.0
    %v1681 = vmax.f32 %v1646, 0.0
    %v1682 = vmax.f32 %v1577, 0.0
    %v1683 = vmax.f32 %v1579, 0.0
    %v1684 = vmax.f32 %v1650, 0.0
    %v1685 = vmax.f32 %v1652, 0.0
    %v1686 = vmax.f32 %v1581, 0.0
    %v1687 = vmax.f32 %v1583, 0.0
    %v1688 = vmax.f32 %v1654, 0.0
    %v1689 = vmax.f32 %v1656, 0.0
    %v1690 = vpack.c.bf16 %v1662, %v1658
    %v1691 = vpack.c.bf16 %v1663, %v1659
    %v1692 = vpack.c.bf16 %v1664, %v1660
    %v1693 = vpack.c.bf16 %v1665, %v1661
    %v1694 = vpack.c.bf16 %v1670, %v1666
    %v1695 = vpack.c.bf16 %v1671, %v1667
    %v1696 = vpack.c.bf16 %v1672, %v1668
    %v1697 = vpack.c.bf16 %v1673, %v1669
    %v1698 = vpack.c.bf16 %v1678, %v1674
    %v1699 = vpack.c.bf16 %v1679, %v1675
    %v1700 = vpack.c.bf16 %v1680, %v1676
    %v1701 = vpack.c.bf16 %v1681, %v1677
    %v1702 = vpack.c.bf16 %v1686, %v1682
    %v1703 = vpack.c.bf16 %v1687, %v1683
    %v1704 = vpack.c.bf16 %v1688, %v1684
    %v1705 = vpack.c.bf16 %v1689, %v1685
    %v1722 = vunpack.c.l.b16 %v1690
    %v1723 = vunpack.c.l.b16 %v1691
    %v1724 = vunpack.c.l.b16 %v1692
    %v1725 = vunpack.c.l.b16 %v1693
    %v1726 = vunpack.c.h.b16 %v1690
    %v1727 = vunpack.c.h.b16 %v1691
    %v1728 = vunpack.c.h.b16 %v1692
    %v1729 = vunpack.c.h.b16 %v1693
    %v1730 = vunpack.c.l.b16 %v1694
    %v1731 = vunpack.c.l.b16 %v1695
    %v1732 = vunpack.c.l.b16 %v1696
    %v1733 = vunpack.c.l.b16 %v1697
    %v1734 = vunpack.c.h.b16 %v1694
    %v1735 = vunpack.c.h.b16 %v1695
    %v1736 = vunpack.c.h.b16 %v1696
    %v1737 = vunpack.c.h.b16 %v1697
    %v1738 = vunpack.c.l.b16 %v1698
    %v1739 = vunpack.c.l.b16 %v1699
    %v1740 = vunpack.c.l.b16 %v1700
    %v1741 = vunpack.c.l.b16 %v1701
    %v1742 = vunpack.c.h.b16 %v1698
    %v1743 = vunpack.c.h.b16 %v1699
    %v1744 = vunpack.c.h.b16 %v1700
    %v1745 = vunpack.c.h.b16 %v1701
    %v1746 = vunpack.c.l.b16 %v1702
    %v1747 = vunpack.c.l.b16 %v1703
    %v1748 = vunpack.c.l.b16 %v1704
    %v1749 = vunpack.c.l.b16 %v1705
    %v1750 = vunpack.c.h.b16 %v1702
    %v1751 = vunpack.c.h.b16 %v1703
    %v1752 = vunpack.c.h.b16 %v1704
    %v1753 = vunpack.c.h.b16 %v1705
    %v1754 = vpack.c.b16 %v1723, %v1722
    %v1755 = vpack.c.b16 %v1725, %v1724
    %v1756 = vpack.c.b16 %v1727, %v1726
    %v1757 = vpack.c.b16 %v1729, %v1728
    %v1758 = vpack.c.b16 %v1731, %v1730
    %v1759 = vpack.c.b16 %v1733, %v1732
    %v1760 = vpack.c.b16 %v1735, %v1734
    %v1761 = vpack.c.b16 %v1737, %v1736
    %v1762 = vpack.c.b16 %v1739, %v1738
    %v1763 = vpack.c.b16 %v1741, %v1740
    %v1764 = vpack.c.b16 %v1743, %v1742
    %v1765 = vpack.c.b16 %v1745, %v1744
    %v1766 = vpack.c.b16 %v1747, %v1746
    %v1767 = vpack.c.b16 %v1749, %v1748
    %v1768 = vpack.c.b16 %v1751, %v1750
    %v1769 = vpack.c.b16 %v1753, %v1752
    %1786 = vst [vmem:[#allocation5] sm:$0xff] %v1754
    %1787 = vst [vmem:[#allocation5 + $0x8] sm:$0xff] %v1755
    %1788 = vst [vmem:[#allocation5 + $0x10] sm:$0xff] %v1756
    %1789 = vst [vmem:[#allocation5 + $0x18] sm:$0xff] %v1757
    %1790 = vst [vmem:[#allocation5 + $0x20] sm:$0xff] %v1758
    %1791 = vst [vmem:[#allocation5 + $0x28] sm:$0xff] %v1759
    %1792 = vst [vmem:[#allocation5 + $0x30] sm:$0xff] %v1760
    %1793 = vst [vmem:[#allocation5 + $0x38] sm:$0xff] %v1761
    %1794 = vst [vmem:[#allocation5 + $0x40] sm:$0xff] %v1762
    %1795 = vst [vmem:[#allocation5 + $0x48] sm:$0xff] %v1763
    %1796 = vst [vmem:[#allocation5 + $0x50] sm:$0xff] %v1764
    %1797 = vst [vmem:[#allocation5 + $0x58] sm:$0xff] %v1765
    %1798 = vst [vmem:[#allocation5 + $0x60] sm:$0xff] %v1766
    %1799 = vst [vmem:[#allocation5 + $0x68] sm:$0xff] %v1767
    %1800 = vst [vmem:[#allocation5 + $0x70] sm:$0xff] %v1768
    %1801 = vst [vmem:[#allocation5 + $0x78] sm:$0xff] %v1769
    %v1802 = vld [vmem:[#allocation5] sm:$0xff]
    %v1803 = vld [vmem:[#allocation5 + $0x8] sm:$0xff]
    %v1804 = vld [vmem:[#allocation5 + $0x10] sm:$0xff]
    %v1805 = vld [vmem:[#allocation5 + $0x18] sm:$0xff]
    %v1806 = vld [vmem:[#allocation5 + $0x20] sm:$0xff]
    %v1807 = vld [vmem:[#allocation5 + $0x28] sm:$0xff]
    %v1808 = vld [vmem:[#allocation5 + $0x30] sm:$0xff]
    %v1809 = vld [vmem:[#allocation5 + $0x38] sm:$0xff]
    %v1810 = vld [vmem:[#allocation5 + $0x40] sm:$0xff]
    %v1811 = vld [vmem:[#allocation5 + $0x48] sm:$0xff]
    %v1812 = vld [vmem:[#allocation5 + $0x50] sm:$0xff]
    %v1813 = vld [vmem:[#allocation5 + $0x58] sm:$0xff]
    %v1814 = vld [vmem:[#allocation5 + $0x60] sm:$0xff]
    %v1815 = vld [vmem:[#allocation5 + $0x68] sm:$0xff]
    %v1816 = vld [vmem:[#allocation5 + $0x70] sm:$0xff]
    %v1817 = vld [vmem:[#allocation5 + $0x78] sm:$0xff]
    %v1818 = vld [vmem:[#allocation6 + $0x600] sm:$0xff]
    %v1819 = vld [vmem:[#allocation6 + $0x608] sm:$0xf]
    %v1820 = vld [vmem:[#allocation6 + $0x610] sm:$0xff]
    %v1821 = vld [vmem:[#allocation6 + $0x618] sm:$0xf]
    %v1822 = vld [vmem:[#allocation6 + $0x620] sm:$0xff]
    %v1823 = vld [vmem:[#allocation6 + $0x628] sm:$0xf]
    %v1824 = vld [vmem:[#allocation6 + $0x630] sm:$0xff]
    %v1825 = vld [vmem:[#allocation6 + $0x638] sm:$0xf]
    %v1826 = vld [vmem:[#allocation6 + $0x640] sm:$0xff]
    %v1827 = vld [vmem:[#allocation6 + $0x648] sm:$0xf]
    %v1828 = vld [vmem:[#allocation6 + $0x650] sm:$0xff]
    %v1829 = vld [vmem:[#allocation6 + $0x658] sm:$0xf]
    %v1830 = vld [vmem:[#allocation6 + $0x660] sm:$0xff]
    %v1831 = vld [vmem:[#allocation6 + $0x668] sm:$0xf]
    %v1832 = vld [vmem:[#allocation6 + $0x670] sm:$0xff]
    %v1833 = vld [vmem:[#allocation6 + $0x678] sm:$0xf]
    %v1834 = vld [vmem:[#allocation6 + $0x680] sm:$0xff]
    %v1835 = vld [vmem:[#allocation6 + $0x688] sm:$0xf]
    %v1836 = vld [vmem:[#allocation6 + $0x690] sm:$0xff]
    %v1837 = vld [vmem:[#allocation6 + $0x698] sm:$0xf]
    %v1838 = vld [vmem:[#allocation6 + $0x6a0] sm:$0xff]
    %v1839 = vld [vmem:[#allocation6 + $0x6a8] sm:$0xf]
    %v1840 = vld [vmem:[#allocation6 + $0x6b0] sm:$0xff]
    %v1841 = vld [vmem:[#allocation6 + $0x6b8] sm:$0xf]
    %v1842 = vld [vmem:[#allocation6 + $0x6c0] sm:$0xff]
    %v1843 = vld [vmem:[#allocation6 + $0x6c8] sm:$0xf]
    %v1844 = vld [vmem:[#allocation6 + $0x6d0] sm:$0xff]
    %v1845 = vld [vmem:[#allocation6 + $0x6d8] sm:$0xf]
    %v1846 = vld [vmem:[#allocation6 + $0x6e0] sm:$0xff]
    %v1847 = vld [vmem:[#allocation6 + $0x6e8] sm:$0xf]
    %v1848 = vld [vmem:[#allocation6 + $0x6f0] sm:$0xff]
    %v1849 = vld [vmem:[#allocation6 + $0x6f8] sm:$0xf]
    %v1850 = vld [vmem:[#allocation6 + $0x700] sm:$0xff]
    %v1851 = vld [vmem:[#allocation6 + $0x708] sm:$0xf]
    %v1852 = vld [vmem:[#allocation6 + $0x710] sm:$0xff]
    %v1853 = vld [vmem:[#allocation6 + $0x718] sm:$0xf]
    %v1854 = vld [vmem:[#allocation6 + $0x720] sm:$0xff]
    %v1855 = vld [vmem:[#allocation6 + $0x728] sm:$0xf]
    %v1856 = vld [vmem:[#allocation6 + $0x730] sm:$0xff]
    %v1857 = vld [vmem:[#allocation6 + $0x738] sm:$0xf]
    %v1858 = vld [vmem:[#allocation6 + $0x740] sm:$0xff]
    %v1859 = vld [vmem:[#allocation6 + $0x748] sm:$0xf]
    %v1860 = vld [vmem:[#allocation6 + $0x750] sm:$0xff]
    %v1861 = vld [vmem:[#allocation6 + $0x758] sm:$0xf]
    %v1862 = vld [vmem:[#allocation6 + $0x760] sm:$0xff]
    %v1863 = vld [vmem:[#allocation6 + $0x768] sm:$0xf]
    %v1864 = vld [vmem:[#allocation6 + $0x770] sm:$0xff]
    %v1865 = vld [vmem:[#allocation6 + $0x778] sm:$0xf]
    %v1866 = vld [vmem:[#allocation6 + $0x780] sm:$0xff]
    %v1867 = vld [vmem:[#allocation6 + $0x788] sm:$0xf]
    %v1868 = vld [vmem:[#allocation6 + $0x790] sm:$0xff]
    %v1869 = vld [vmem:[#allocation6 + $0x798] sm:$0xf]
    %v1870 = vld [vmem:[#allocation6 + $0x7a0] sm:$0xff]
    %v1871 = vld [vmem:[#allocation6 + $0x7a8] sm:$0xf]
    %v1872 = vld [vmem:[#allocation6 + $0x7b0] sm:$0xff]
    %v1873 = vld [vmem:[#allocation6 + $0x7b8] sm:$0xf]
    %v1874 = vld [vmem:[#allocation6 + $0x7c0] sm:$0xff]
    %v1875 = vld [vmem:[#allocation6 + $0x7c8] sm:$0xf]
    %v1876 = vld [vmem:[#allocation6 + $0x7d0] sm:$0xff]
    %v1877 = vld [vmem:[#allocation6 + $0x7d8] sm:$0xf]
    %v1878 = vld [vmem:[#allocation6 + $0x7e0] sm:$0xff]
    %v1879 = vld [vmem:[#allocation6 + $0x7e8] sm:$0xf]
    %v1880 = vld [vmem:[#allocation6 + $0x7f0] sm:$0xff]
    %v1881 = vld [vmem:[#allocation6 + $0x7f8] sm:$0xf]
    %v1882 = vld [vmem:[#allocation6 + $0x800] sm:$0xff]
    %v1883 = vld [vmem:[#allocation6 + $0x808] sm:$0xf]
    %v1884 = vld [vmem:[#allocation6 + $0x810] sm:$0xff]
    %v1885 = vld [vmem:[#allocation6 + $0x818] sm:$0xf]
    %v1886 = vld [vmem:[#allocation6 + $0x820] sm:$0xff]
    %v1887 = vld [vmem:[#allocation6 + $0x828] sm:$0xf]
    %v1888 = vld [vmem:[#allocation6 + $0x830] sm:$0xff]
    %v1889 = vld [vmem:[#allocation6 + $0x838] sm:$0xf]
    %v1890 = vld [vmem:[#allocation6 + $0x840] sm:$0xff]
    %v1891 = vld [vmem:[#allocation6 + $0x848] sm:$0xf]
    %v1892 = vld [vmem:[#allocation6 + $0x850] sm:$0xff]
    %v1893 = vld [vmem:[#allocation6 + $0x858] sm:$0xf]
    %v1894 = vld [vmem:[#allocation6 + $0x860] sm:$0xff]
    %v1895 = vld [vmem:[#allocation6 + $0x868] sm:$0xf]
    %v1896 = vld [vmem:[#allocation6 + $0x870] sm:$0xff]
    %v1897 = vld [vmem:[#allocation6 + $0x878] sm:$0xf]
    %v1898 = vld [vmem:[#allocation6 + $0x880] sm:$0xff]
    %v1899 = vld [vmem:[#allocation6 + $0x888] sm:$0xf]
    %v1900 = vld [vmem:[#allocation6 + $0x890] sm:$0xff]
    %v1901 = vld [vmem:[#allocation6 + $0x898] sm:$0xf]
    %v1902 = vld [vmem:[#allocation6 + $0x8a0] sm:$0xff]
    %v1903 = vld [vmem:[#allocation6 + $0x8a8] sm:$0xf]
    %v1904 = vld [vmem:[#allocation6 + $0x8b0] sm:$0xff]
    %v1905 = vld [vmem:[#allocation6 + $0x8b8] sm:$0xf]
    %v1906 = vld [vmem:[#allocation6 + $0x8c0] sm:$0xff]
    %v1907 = vld [vmem:[#allocation6 + $0x8c8] sm:$0xf]
    %v1908 = vld [vmem:[#allocation6 + $0x8d0] sm:$0xff]
    %v1909 = vld [vmem:[#allocation6 + $0x8d8] sm:$0xf]
    %v1910 = vld [vmem:[#allocation6 + $0x8e0] sm:$0xff]
    %v1911 = vld [vmem:[#allocation6 + $0x8e8] sm:$0xf]
    %v1912 = vld [vmem:[#allocation6 + $0x8f0] sm:$0xff]
    %v1913 = vld [vmem:[#allocation6 + $0x8f8] sm:$0xf]
    %v1914 = vld [vmem:[#allocation6 + $0x900] sm:$0xff]
    %v1915 = vld [vmem:[#allocation6 + $0x908] sm:$0xf]
    %v1916 = vld [vmem:[#allocation6 + $0x910] sm:$0xff]
    %v1917 = vld [vmem:[#allocation6 + $0x918] sm:$0xf]
    %v1918 = vld [vmem:[#allocation6 + $0x920] sm:$0xff]
    %v1919 = vld [vmem:[#allocation6 + $0x928] sm:$0xf]
    %v1920 = vld [vmem:[#allocation6 + $0x930] sm:$0xff]
    %v1921 = vld [vmem:[#allocation6 + $0x938] sm:$0xf]
    %v1922 = vld [vmem:[#allocation6 + $0x940] sm:$0xff]
    %v1923 = vld [vmem:[#allocation6 + $0x948] sm:$0xf]
    %v1924 = vld [vmem:[#allocation6 + $0x950] sm:$0xff]
    %v1925 = vld [vmem:[#allocation6 + $0x958] sm:$0xf]
    %v1926 = vld [vmem:[#allocation6 + $0x960] sm:$0xff]
    %v1927 = vld [vmem:[#allocation6 + $0x968] sm:$0xf]
    %v1928 = vld [vmem:[#allocation6 + $0x970] sm:$0xff]
    %v1929 = vld [vmem:[#allocation6 + $0x978] sm:$0xf]
    %v1930 = vld [vmem:[#allocation6 + $0x980] sm:$0xff]
    %v1931 = vld [vmem:[#allocation6 + $0x988] sm:$0xf]
    %v1932 = vld [vmem:[#allocation6 + $0x990] sm:$0xff]
    %v1933 = vld [vmem:[#allocation6 + $0x998] sm:$0xf]
    %v1934 = vld [vmem:[#allocation6 + $0x9a0] sm:$0xff]
    %v1935 = vld [vmem:[#allocation6 + $0x9a8] sm:$0xf]
    %v1936 = vld [vmem:[#allocation6 + $0x9b0] sm:$0xff]
    %v1937 = vld [vmem:[#allocation6 + $0x9b8] sm:$0xf]
    %v1938 = vld [vmem:[#allocation6 + $0x9c0] sm:$0xff]
    %v1939 = vld [vmem:[#allocation6 + $0x9c8] sm:$0xf]
    %v1940 = vld [vmem:[#allocation6 + $0x9d0] sm:$0xff]
    %v1941 = vld [vmem:[#allocation6 + $0x9d8] sm:$0xf]
    %v1942 = vld [vmem:[#allocation6 + $0x9e0] sm:$0xff]
    %v1943 = vld [vmem:[#allocation6 + $0x9e8] sm:$0xf]
    %v1944 = vld [vmem:[#allocation6 + $0x9f0] sm:$0xff]
    %v1945 = vld [vmem:[#allocation6 + $0x9f8] sm:$0xf]
    %s1946 = scalar_lea.vmem [#allocation8], 4
    %v1947 = vld [vmem:[%s1946] ss:$8 sm:$0x7]
    %v1949 = vlaneseq
    %v1950 = vshrl.u32 %v1949, 7
    %v1951 = vsub.s32 0, %v1950
    %v1952 = vrot.slane %v1947, %v1951
    %v1953 = vlaneseq
    %v1954 = vshrl.u32 %v1953, 7
    %v1955 = vsub.s32 1, %v1954
    %v1956 = vrot.slane %v1947, %v1955
    %v1957 = vlaneseq
    %v1958 = vshrl.u32 %v1957, 7
    %v1959 = vsub.s32 2, %v1958
    %v1960 = vrot.slane %v1947, %v1959
    %v1980 = vunpack.c.l.b16 %v1802
    %v1981 = vunpack.c.h.b16 %v1802
    %v1982 = vunpack.c.l.b16 %v1803
    %v1983 = vunpack.c.h.b16 %v1803
    %v1984 = vunpack.c.l.b16 %v1804
    %v1985 = vunpack.c.h.b16 %v1804
    %v1986 = vunpack.c.l.b16 %v1805
    %v1987 = vunpack.c.h.b16 %v1805
    %v1988 = vunpack.c.l.b16 %v1806
    %v1989 = vunpack.c.h.b16 %v1806
    %v1990 = vunpack.c.l.b16 %v1807
    %v1991 = vunpack.c.h.b16 %v1807
    %v1992 = vunpack.c.l.b16 %v1808
    %v1993 = vunpack.c.h.b16 %v1808
    %v1994 = vunpack.c.l.b16 %v1809
    %v1995 = vunpack.c.h.b16 %v1809
    %v1996 = vunpack.c.l.b16 %v1810
    %v1997 = vunpack.c.h.b16 %v1810
    %v1998 = vunpack.c.l.b16 %v1811
    %v1999 = vunpack.c.h.b16 %v1811
    %v2000 = vunpack.c.l.b16 %v1812
    %v2001 = vunpack.c.h.b16 %v1812
    %v2002 = vunpack.c.l.b16 %v1813
    %v2003 = vunpack.c.h.b16 %v1813
    %v2004 = vunpack.c.l.b16 %v1814
    %v2005 = vunpack.c.h.b16 %v1814
    %v2006 = vunpack.c.l.b16 %v1815
    %v2007 = vunpack.c.h.b16 %v1815
    %v2008 = vunpack.c.l.b16 %v1816
    %v2009 = vunpack.c.h.b16 %v1816
    %v2010 = vunpack.c.l.b16 %v1817
    %v2011 = vunpack.c.h.b16 %v1817
    %v2012 = vpack.c.b16 %v1984, %v1980
    %v2013 = vpack.c.b16 %v1985, %v1981
    %v2014 = vpack.c.b16 %v1986, %v1982
    %v2015 = vpack.c.b16 %v1987, %v1983
    %v2016 = vpack.c.b16 %v1992, %v1988
    %v2017 = vpack.c.b16 %v1993, %v1989
    %v2018 = vpack.c.b16 %v1994, %v1990
    %v2019 = vpack.c.b16 %v1995, %v1991
    %v2020 = vpack.c.b16 %v2000, %v1996
    %v2021 = vpack.c.b16 %v2001, %v1997
    %v2022 = vpack.c.b16 %v2002, %v1998
    %v2023 = vpack.c.b16 %v2003, %v1999
    %v2024 = vpack.c.b16 %v2008, %v2004
    %v2025 = vpack.c.b16 %v2009, %v2005
    %v2026 = vpack.c.b16 %v2010, %v2006
    %v2027 = vpack.c.b16 %v2011, %v2007
    %v2172 = vunpack.c.l.b16 %v1818
    %v2173 = vunpack.c.h.b16 %v1818
    %v2174 = vunpack.c.l.b16 %v1819
    %v2175 = vunpack.c.l.b16 %v1820
    %v2176 = vunpack.c.h.b16 %v1820
    %v2177 = vunpack.c.l.b16 %v1821
    %v2178 = vunpack.c.l.b16 %v1822
    %v2179 = vunpack.c.h.b16 %v1822
    %v2180 = vunpack.c.l.b16 %v1823
    %v2181 = vunpack.c.l.b16 %v1824
    %v2182 = vunpack.c.h.b16 %v1824
    %v2183 = vunpack.c.l.b16 %v1825
    %v2184 = vunpack.c.l.b16 %v1826
    %v2185 = vunpack.c.h.b16 %v1826
    %v2186 = vunpack.c.l.b16 %v1827
    %v2187 = vunpack.c.l.b16 %v1828
    %v2188 = vunpack.c.h.b16 %v1828
    %v2189 = vunpack.c.l.b16 %v1829
    %v2190 = vunpack.c.l.b16 %v1830
    %v2191 = vunpack.c.h.b16 %v1830
    %v2192 = vunpack.c.l.b16 %v1831
    %v2193 = vunpack.c.l.b16 %v1832
    %v2194 = vunpack.c.h.b16 %v1832
    %v2195 = vunpack.c.l.b16 %v1833
    %v2196 = vunpack.c.l.b16 %v1834
    %v2197 = vunpack.c.h.b16 %v1834
    %v2198 = vunpack.c.l.b16 %v1835
    %v2199 = vunpack.c.l.b16 %v1836
    %v2200 = vunpack.c.h.b16 %v1836
    %v2201 = vunpack.c.l.b16 %v1837
    %v2202 = vunpack.c.l.b16 %v1838
    %v2203 = vunpack.c.h.b16 %v1838
    %v2204 = vunpack.c.l.b16 %v1839
    %v2205 = vunpack.c.l.b16 %v1840
    %v2206 = vunpack.c.h.b16 %v1840
    %v2207 = vunpack.c.l.b16 %v1841
    %v2208 = vunpack.c.l.b16 %v1842
    %v2209 = vunpack.c.h.b16 %v1842
    %v2210 = vunpack.c.l.b16 %v1843
    %v2211 = vunpack.c.l.b16 %v1844
    %v2212 = vunpack.c.h.b16 %v1844
    %v2213 = vunpack.c.l.b16 %v1845
    %v2214 = vunpack.c.l.b16 %v1846
    %v2215 = vunpack.c.h.b16 %v1846
    %v2216 = vunpack.c.l.b16 %v1847
    %v2217 = vunpack.c.l.b16 %v1848
    %v2218 = vunpack.c.h.b16 %v1848
    %v2219 = vunpack.c.l.b16 %v1849
    %v2220 = vunpack.c.l.b16 %v1850
    %v2221 = vunpack.c.h.b16 %v1850
    %v2222 = vunpack.c.l.b16 %v1851
    %v2223 = vunpack.c.l.b16 %v1852
    %v2224 = vunpack.c.h.b16 %v1852
    %v2225 = vunpack.c.l.b16 %v1853
    %v2226 = vunpack.c.l.b16 %v1854
    %v2227 = vunpack.c.h.b16 %v1854
    %v2228 = vunpack.c.l.b16 %v1855
    %v2229 = vunpack.c.l.b16 %v1856
    %v2230 = vunpack.c.h.b16 %v1856
    %v2231 = vunpack.c.l.b16 %v1857
    %v2232 = vunpack.c.l.b16 %v1858
    %v2233 = vunpack.c.h.b16 %v1858
    %v2234 = vunpack.c.l.b16 %v1859
    %v2235 = vunpack.c.l.b16 %v1860
    %v2236 = vunpack.c.h.b16 %v1860
    %v2237 = vunpack.c.l.b16 %v1861
    %v2238 = vunpack.c.l.b16 %v1862
    %v2239 = vunpack.c.h.b16 %v1862
    %v2240 = vunpack.c.l.b16 %v1863
    %v2241 = vunpack.c.l.b16 %v1864
    %v2242 = vunpack.c.h.b16 %v1864
    %v2243 = vunpack.c.l.b16 %v1865
    %v2244 = vunpack.c.l.b16 %v1866
    %v2245 = vunpack.c.h.b16 %v1866
    %v2246 = vunpack.c.l.b16 %v1867
    %v2247 = vunpack.c.l.b16 %v1868
    %v2248 = vunpack.c.h.b16 %v1868
    %v2249 = vunpack.c.l.b16 %v1869
    %v2250 = vunpack.c.l.b16 %v1870
    %v2251 = vunpack.c.h.b16 %v1870
    %v2252 = vunpack.c.l.b16 %v1871
    %v2253 = vunpack.c.l.b16 %v1872
    %v2254 = vunpack.c.h.b16 %v1872
    %v2255 = vunpack.c.l.b16 %v1873
    %v2256 = vunpack.c.l.b16 %v1874
    %v2257 = vunpack.c.h.b16 %v1874
    %v2258 = vunpack.c.l.b16 %v1875
    %v2259 = vunpack.c.l.b16 %v1876
    %v2260 = vunpack.c.h.b16 %v1876
    %v2261 = vunpack.c.l.b16 %v1877
    %v2262 = vunpack.c.l.b16 %v1878
    %v2263 = vunpack.c.h.b16 %v1878
    %v2264 = vunpack.c.l.b16 %v1879
    %v2265 = vunpack.c.l.b16 %v1880
    %v2266 = vunpack.c.h.b16 %v1880
    %v2267 = vunpack.c.l.b16 %v1881
    %v2268 = vunpack.c.l.b16 %v1882
    %v2269 = vunpack.c.h.b16 %v1882
    %v2270 = vunpack.c.l.b16 %v1883
    %v2271 = vunpack.c.l.b16 %v1884
    %v2272 = vunpack.c.h.b16 %v1884
    %v2273 = vunpack.c.l.b16 %v1885
    %v2274 = vunpack.c.l.b16 %v1886
    %v2275 = vunpack.c.h.b16 %v1886
    %v2276 = vunpack.c.l.b16 %v1887
    %v2277 = vunpack.c.l.b16 %v1888
    %v2278 = vunpack.c.h.b16 %v1888
    %v2279 = vunpack.c.l.b16 %v1889
    %v2280 = vunpack.c.l.b16 %v1890
    %v2281 = vunpack.c.h.b16 %v1890
    %v2282 = vunpack.c.l.b16 %v1891
    %v2283 = vunpack.c.l.b16 %v1892
    %v2284 = vunpack.c.h.b16 %v1892
    %v2285 = vunpack.c.l.b16 %v1893
    %v2286 = vunpack.c.l.b16 %v1894
    %v2287 = vunpack.c.h.b16 %v1894
    %v2288 = vunpack.c.l.b16 %v1895
    %v2289 = vunpack.c.l.b16 %v1896
    %v2290 = vunpack.c.h.b16 %v1896
    %v2291 = vunpack.c.l.b16 %v1897
    %v2292 = vunpack.c.l.b16 %v1898
    %v2293 = vunpack.c.h.b16 %v1898
    %v2294 = vunpack.c.l.b16 %v1899
    %v2295 = vunpack.c.l.b16 %v1900
    %v2296 = vunpack.c.h.b16 %v1900
    %v2297 = vunpack.c.l.b16 %v1901
    %v2298 = vunpack.c.l.b16 %v1902
    %v2299 = vunpack.c.h.b16 %v1902
    %v2300 = vunpack.c.l.b16 %v1903
    %v2301 = vunpack.c.l.b16 %v1904
    %v2302 = vunpack.c.h.b16 %v1904
    %v2303 = vunpack.c.l.b16 %v1905
    %v2304 = vunpack.c.l.b16 %v1906
    %v2305 = vunpack.c.h.b16 %v1906
    %v2306 = vunpack.c.l.b16 %v1907
    %v2307 = vunpack.c.l.b16 %v1908
    %v2308 = vunpack.c.h.b16 %v1908
    %v2309 = vunpack.c.l.b16 %v1909
    %v2310 = vunpack.c.l.b16 %v1910
    %v2311 = vunpack.c.h.b16 %v1910
    %v2312 = vunpack.c.l.b16 %v1911
    %v2313 = vunpack.c.l.b16 %v1912
    %v2314 = vunpack.c.h.b16 %v1912
    %v2315 = vunpack.c.l.b16 %v1913
    %v2316 = vunpack.c.l.b16 %v1914
    %v2317 = vunpack.c.h.b16 %v1914
    %v2318 = vunpack.c.l.b16 %v1915
    %v2319 = vunpack.c.l.b16 %v1916
    %v2320 = vunpack.c.h.b16 %v1916
    %v2321 = vunpack.c.l.b16 %v1917
    %v2322 = vunpack.c.l.b16 %v1918
    %v2323 = vunpack.c.h.b16 %v1918
    %v2324 = vunpack.c.l.b16 %v1919
    %v2325 = vunpack.c.l.b16 %v1920
    %v2326 = vunpack.c.h.b16 %v1920
    %v2327 = vunpack.c.l.b16 %v1921
    %v2328 = vunpack.c.l.b16 %v1922
    %v2329 = vunpack.c.h.b16 %v1922
    %v2330 = vunpack.c.l.b16 %v1923
    %v2331 = vunpack.c.l.b16 %v1924
    %v2332 = vunpack.c.h.b16 %v1924
    %v2333 = vunpack.c.l.b16 %v1925
    %v2334 = vunpack.c.l.b16 %v1926
    %v2335 = vunpack.c.h.b16 %v1926
    %v2336 = vunpack.c.l.b16 %v1927
    %v2337 = vunpack.c.l.b16 %v1928
    %v2338 = vunpack.c.h.b16 %v1928
    %v2339 = vunpack.c.l.b16 %v1929
    %v2340 = vunpack.c.l.b16 %v1930
    %v2341 = vunpack.c.h.b16 %v1930
    %v2342 = vunpack.c.l.b16 %v1931
    %v2343 = vunpack.c.l.b16 %v1932
    %v2344 = vunpack.c.h.b16 %v1932
    %v2345 = vunpack.c.l.b16 %v1933
    %v2346 = vunpack.c.l.b16 %v1934
    %v2347 = vunpack.c.h.b16 %v1934
    %v2348 = vunpack.c.l.b16 %v1935
    %v2349 = vunpack.c.l.b16 %v1936
    %v2350 = vunpack.c.h.b16 %v1936
    %v2351 = vunpack.c.l.b16 %v1937
    %v2352 = vunpack.c.l.b16 %v1938
    %v2353 = vunpack.c.h.b16 %v1938
    %v2354 = vunpack.c.l.b16 %v1939
    %v2355 = vunpack.c.l.b16 %v1940
    %v2356 = vunpack.c.h.b16 %v1940
    %v2357 = vunpack.c.l.b16 %v1941
    %v2358 = vunpack.c.l.b16 %v1942
    %v2359 = vunpack.c.h.b16 %v1942
    %v2360 = vunpack.c.l.b16 %v1943
    %v2361 = vunpack.c.l.b16 %v1944
    %v2362 = vunpack.c.h.b16 %v1944
    %v2363 = vunpack.c.l.b16 %v1945
    %v2364 = vpack.c.b16 %v2175, %v2172
    %v2365 = vpack.c.b16 %v2176, %v2173
    %v2366 = vpack.c.b16 %v2177, %v2174
    %v2367 = vpack.c.b16 %v2181, %v2178
    %v2368 = vpack.c.b16 %v2182, %v2179
    %v2369 = vpack.c.b16 %v2183, %v2180
    %v2370 = vpack.c.b16 %v2187, %v2184
    %v2371 = vpack.c.b16 %v2188, %v2185
    %v2372 = vpack.c.b16 %v2189, %v2186
    %v2373 = vpack.c.b16 %v2193, %v2190
    %v2374 = vpack.c.b16 %v2194, %v2191
    %v2375 = vpack.c.b16 %v2195, %v2192
    %v2376 = vpack.c.b16 %v2199, %v2196
    %v2377 = vpack.c.b16 %v2200, %v2197
    %v2378 = vpack.c.b16 %v2201, %v2198
    %v2379 = vpack.c.b16 %v2205, %v2202
    %v2380 = vpack.c.b16 %v2206, %v2203
    %v2381 = vpack.c.b16 %v2207, %v2204
    %v2382 = vpack.c.b16 %v2211, %v2208
    %v2383 = vpack.c.b16 %v2212, %v2209
    %v2384 = vpack.c.b16 %v2213, %v2210
    %v2385 = vpack.c.b16 %v2217, %v2214
    %v2386 = vpack.c.b16 %v2218, %v2215
    %v2387 = vpack.c.b16 %v2219, %v2216
    %v2388 = vpack.c.b16 %v2223, %v2220
    %v2389 = vpack.c.b16 %v2224, %v2221
    %v2390 = vpack.c.b16 %v2225, %v2222
    %v2391 = vpack.c.b16 %v2229, %v2226
    %v2392 = vpack.c.b16 %v2230, %v2227
    %v2393 = vpack.c.b16 %v2231, %v2228
    %v2394 = vpack.c.b16 %v2235, %v2232
    %v2395 = vpack.c.b16 %v2236, %v2233
    %v2396 = vpack.c.b16 %v2237, %v2234
    %v2397 = vpack.c.b16 %v2241, %v2238
    %v2398 = vpack.c.b16 %v2242, %v2239
    %v2399 = vpack.c.b16 %v2243, %v2240
    %v2400 = vpack.c.b16 %v2247, %v2244
    %v2401 = vpack.c.b16 %v2248, %v2245
    %v2402 = vpack.c.b16 %v2249, %v2246
    %v2403 = vpack.c.b16 %v2253, %v2250
    %v2404 = vpack.c.b16 %v2254, %v2251
    %v2405 = vpack.c.b16 %v2255, %v2252
    %v2406 = vpack.c.b16 %v2259, %v2256
    %v2407 = vpack.c.b16 %v2260, %v2257
    %v2408 = vpack.c.b16 %v2261, %v2258
    %v2409 = vpack.c.b16 %v2265, %v2262
    %v2410 = vpack.c.b16 %v2266, %v2263
    %v2411 = vpack.c.b16 %v2267, %v2264
    %v2412 = vpack.c.b16 %v2271, %v2268
    %v2413 = vpack.c.b16 %v2272, %v2269
    %v2414 = vpack.c.b16 %v2273, %v2270
    %v2415 = vpack.c.b16 %v2277, %v2274
    %v2416 = vpack.c.b16 %v2278, %v2275
    %v2417 = vpack.c.b16 %v2279, %v2276
    %v2418 = vpack.c.b16 %v2283, %v2280
    %v2419 = vpack.c.b16 %v2284, %v2281
    %v2420 = vpack.c.b16 %v2285, %v2282
    %v2421 = vpack.c.b16 %v2289, %v2286
    %v2422 = vpack.c.b16 %v2290, %v2287
    %v2423 = vpack.c.b16 %v2291, %v2288
    %v2424 = vpack.c.b16 %v2295, %v2292
    %v2425 = vpack.c.b16 %v2296, %v2293
    %v2426 = vpack.c.b16 %v2297, %v2294
    %v2427 = vpack.c.b16 %v2301, %v2298
    %v2428 = vpack.c.b16 %v2302, %v2299
    %v2429 = vpack.c.b16 %v2303, %v2300
    %v2430 = vpack.c.b16 %v2307, %v2304
    %v2431 = vpack.c.b16 %v2308, %v2305
    %v2432 = vpack.c.b16 %v2309, %v2306
    %v2433 = vpack.c.b16 %v2313, %v2310
    %v2434 = vpack.c.b16 %v2314, %v2311
    %v2435 = vpack.c.b16 %v2315, %v2312
    %v2436 = vpack.c.b16 %v2319, %v2316
    %v2437 = vpack.c.b16 %v2320, %v2317
    %v2438 = vpack.c.b16 %v2321, %v2318
    %v2439 = vpack.c.b16 %v2325, %v2322
    %v2440 = vpack.c.b16 %v2326, %v2323
    %v2441 = vpack.c.b16 %v2327, %v2324
    %v2442 = vpack.c.b16 %v2331, %v2328
    %v2443 = vpack.c.b16 %v2332, %v2329
    %v2444 = vpack.c.b16 %v2333, %v2330
    %v2445 = vpack.c.b16 %v2337, %v2334
    %v2446 = vpack.c.b16 %v2338, %v2335
    %v2447 = vpack.c.b16 %v2339, %v2336
    %v2448 = vpack.c.b16 %v2343, %v2340
    %v2449 = vpack.c.b16 %v2344, %v2341
    %v2450 = vpack.c.b16 %v2345, %v2342
    %v2451 = vpack.c.b16 %v2349, %v2346
    %v2452 = vpack.c.b16 %v2350, %v2347
    %v2453 = vpack.c.b16 %v2351, %v2348
    %v2454 = vpack.c.b16 %v2355, %v2352
    %v2455 = vpack.c.b16 %v2356, %v2353
    %v2456 = vpack.c.b16 %v2357, %v2354
    %v2457 = vpack.c.b16 %v2361, %v2358
    %v2458 = vpack.c.b16 %v2362, %v2359
    %v2459 = vpack.c.b16 %v2363, %v2360
    %2556 = vmatprep.subr.bf16.mxu0 %v2386
    %2557 = vmatpush1.bf16.msra.mxu0 %v2385
    %2558 = vmatprep.subr.bf16.mxu0 %v2383
    %2559 = vmatpush1.bf16.msra.mxu0 %v2382
    %2560 = vmatprep.subr.bf16.mxu0 %v2380
    %2561 = vmatpush1.bf16.msra.mxu0 %v2379
    %2562 = vmatprep.subr.bf16.mxu0 %v2377
    %2563 = vmatpush1.bf16.msra.mxu0 %v2376
    %2564 = vmatprep.subr.bf16.mxu0 %v2374
    %2565 = vmatpush1.bf16.msra.mxu0 %v2373
    %2566 = vmatprep.subr.bf16.mxu0 %v2371
    %2567 = vmatpush1.bf16.msra.mxu0 %v2370
    %2568 = vmatprep.subr.bf16.mxu0 %v2368
    %2569 = vmatpush1.bf16.msra.mxu0 %v2367
    %2570 = vmatprep.subr.bf16.mxu0 %v2365
    %2571 = vmatpush1.bf16.msra.mxu0 %v2364
    %2572 = vmatprep.subr.bf16.mxu0 %v2410
    %2573 = vmatpush2.bf16.msra.mxu0 %v2409
    %2574 = vmatprep.subr.bf16.mxu0 %v2407
    %2575 = vmatpush2.bf16.msra.mxu0 %v2406
    %2576 = vmatprep.subr.bf16.mxu0 %v2404
    %2577 = vmatpush2.bf16.msra.mxu0 %v2403
    %2578 = vmatprep.subr.bf16.mxu0 %v2401
    %2579 = vmatpush2.bf16.msra.mxu0 %v2400
    %2580 = vmatprep.subr.bf16.mxu0 %v2398
    %2581 = vmatpush2.bf16.msra.mxu0 %v2397
    %2582 = vmatprep.subr.bf16.mxu0 %v2395
    %2583 = vmatpush2.bf16.msra.mxu0 %v2394
    %2584 = vmatprep.subr.bf16.mxu0 %v2392
    %2585 = vmatpush2.bf16.msra.mxu0 %v2391
    %2586 = vmatprep.subr.bf16.mxu0 %v2389
    %2587 = vmatpush2.bf16.msra.mxu0 %v2388
    %2588 = vmatprep.mubr.bf16.mxu0 %v2013
    %2589 = vmatmul.mubr.bf16.gmra.mxu0 %v2012
    %v2590 = vpop.f32.mrf.mxu0
    %v2591 = vadd.f32 %v1952, %v2590
    %v2592 = vpop.f32.mrf.mxu0
    %v2593 = vadd.f32 %v1956, %v2592
    %v2594 = vpop.f32.mrf.mxu0
    %v2595 = vadd.f32 %v1952, %v2594
    %v2596 = vpop.f32.mrf.mxu0
    %v2597 = vadd.f32 %v1956, %v2596
    %2598 = vmatprep.mubr.bf16.mxu0 %v2017
    %2599 = vmatmul.mubr.bf16.gmra.mxu0 %v2016
    %v2600 = vpop.f32.mrf.mxu0
    %v2601 = vadd.f32 %v1952, %v2600
    %v2602 = vpop.f32.mrf.mxu0
    %v2603 = vadd.f32 %v1956, %v2602
    %v2604 = vpop.f32.mrf.mxu0
    %v2605 = vadd.f32 %v1952, %v2604
    %v2606 = vpop.f32.mrf.mxu0
    %v2607 = vadd.f32 %v1956, %v2606
    %2608 = vmatprep.mubr.bf16.mxu0 %v2021
    %2609 = vmatmul.mubr.bf16.gmra.mxu0 %v2020
    %v2610 = vpop.f32.mrf.mxu0
    %v2611 = vadd.f32 %v1952, %v2610
    %v2612 = vpop.f32.mrf.mxu0
    %v2613 = vadd.f32 %v1956, %v2612
    %v2614 = vpop.f32.mrf.mxu0
    %v2615 = vadd.f32 %v1952, %v2614
    %v2616 = vpop.f32.mrf.mxu0
    %v2617 = vadd.f32 %v1956, %v2616
    %2618 = vmatprep.mubr.bf16.mxu0 %v2025
    %2619 = vmatmul.mubr.bf16.gmra.mxu0 %v2024
    %v2620 = vpop.f32.mrf.mxu0
    %v2621 = vadd.f32 %v1952, %v2620
    %v2622 = vpop.f32.mrf.mxu0
    %v2623 = vadd.f32 %v1956, %v2622
    %v2624 = vpop.f32.mrf.mxu0
    %v2625 = vadd.f32 %v1952, %v2624
    %v2626 = vpop.f32.mrf.mxu0
    %v2627 = vadd.f32 %v1956, %v2626
    %2628 = vdwg.mxu0
    %2629 = vmatprep.subr.bf16.mxu0 %v2434
    %2630 = vmatpush1.bf16.msra.mxu0 %v2433
    %2631 = vmatprep.subr.bf16.mxu0 %v2431
    %2632 = vmatpush1.bf16.msra.mxu0 %v2430
    %2633 = vmatprep.subr.bf16.mxu0 %v2428
    %2634 = vmatpush1.bf16.msra.mxu0 %v2427
    %2635 = vmatprep.subr.bf16.mxu0 %v2425
    %2636 = vmatpush1.bf16.msra.mxu0 %v2424
    %2637 = vmatprep.subr.bf16.mxu0 %v2422
    %2638 = vmatpush1.bf16.msra.mxu0 %v2421
    %2639 = vmatprep.subr.bf16.mxu0 %v2419
    %2640 = vmatpush1.bf16.msra.mxu0 %v2418
    %2641 = vmatprep.subr.bf16.mxu0 %v2416
    %2642 = vmatpush1.bf16.msra.mxu0 %v2415
    %2643 = vmatprep.subr.bf16.mxu0 %v2413
    %2644 = vmatpush1.bf16.msra.mxu0 %v2412
    %2645 = vmatprep.subr.bf16.mxu0 %v2458
    %2646 = vmatpush2.bf16.msra.mxu0 %v2457
    %2647 = vmatprep.subr.bf16.mxu0 %v2455
    %2648 = vmatpush2.bf16.msra.mxu0 %v2454
    %2649 = vmatprep.subr.bf16.mxu0 %v2452
    %2650 = vmatpush2.bf16.msra.mxu0 %v2451
    %2651 = vmatprep.subr.bf16.mxu0 %v2449
    %2652 = vmatpush2.bf16.msra.mxu0 %v2448
    %2653 = vmatprep.subr.bf16.mxu0 %v2446
    %2654 = vmatpush2.bf16.msra.mxu0 %v2445
    %2655 = vmatprep.subr.bf16.mxu0 %v2443
    %2656 = vmatpush2.bf16.msra.mxu0 %v2442
    %2657 = vmatprep.subr.bf16.mxu0 %v2440
    %2658 = vmatpush2.bf16.msra.mxu0 %v2439
    %2659 = vmatprep.subr.bf16.mxu0 %v2437
    %2660 = vmatpush2.bf16.msra.mxu0 %v2436
    %2661 = vmatprep.mubr.bf16.mxu0 %v2015
    %2662 = vmatmul.mubr.bf16.gmra.mxu0 %v2014
    %v2663 = vpop.f32.mrf.mxu0
    %v2664 = vadd.f32 %v2591, %v2663
    %v2665 = vpop.f32.mrf.mxu0
    %v2666 = vadd.f32 %v2593, %v2665
    %v2667 = vpop.f32.mrf.mxu0
    %v2668 = vadd.f32 %v2595, %v2667
    %v2669 = vpop.f32.mrf.mxu0
    %v2670 = vadd.f32 %v2597, %v2669
    %2671 = vmatprep.mubr.bf16.mxu0 %v2019
    %2672 = vmatmul.mubr.bf16.gmra.mxu0 %v2018
    %v2673 = vpop.f32.mrf.mxu0
    %v2674 = vadd.f32 %v2601, %v2673
    %v2675 = vpop.f32.mrf.mxu0
    %v2676 = vadd.f32 %v2603, %v2675
    %v2677 = vpop.f32.mrf.mxu0
    %v2678 = vadd.f32 %v2605, %v2677
    %v2679 = vpop.f32.mrf.mxu0
    %v2680 = vadd.f32 %v2607, %v2679
    %2681 = vmatprep.mubr.bf16.mxu0 %v2023
    %2682 = vmatmul.mubr.bf16.gmra.mxu0 %v2022
    %v2683 = vpop.f32.mrf.mxu0
    %v2684 = vadd.f32 %v2611, %v2683
    %v2685 = vpop.f32.mrf.mxu0
    %v2686 = vadd.f32 %v2613, %v2685
    %v2687 = vpop.f32.mrf.mxu0
    %v2688 = vadd.f32 %v2615, %v2687
    %v2689 = vpop.f32.mrf.mxu0
    %v2690 = vadd.f32 %v2617, %v2689
    %2691 = vmatprep.mubr.bf16.mxu0 %v2027
    %2692 = vmatmul.mubr.bf16.gmra.mxu0 %v2026
    %v2693 = vpop.f32.mrf.mxu0
    %v2694 = vadd.f32 %v2621, %v2693
    %v2695 = vpop.f32.mrf.mxu0
    %v2696 = vadd.f32 %v2623, %v2695
    %v2697 = vpop.f32.mrf.mxu0
    %v2698 = vadd.f32 %v2625, %v2697
    %v2699 = vpop.f32.mrf.mxu0
    %v2700 = vadd.f32 %v2627, %v2699
    %2701 = vdwg.mxu0
    %2702 = vmatprep.subr.bf16.mxu0 0
    %2703 = vmatpush1.bf16.msra.mxu0 %v2387
    %2704 = vmatprep.subr.bf16.mxu0 0
    %2705 = vmatpush1.bf16.msra.mxu0 %v2384
    %2706 = vmatprep.subr.bf16.mxu0 0
    %2707 = vmatpush1.bf16.msra.mxu0 %v2381
    %2708 = vmatprep.subr.bf16.mxu0 0
    %2709 = vmatpush1.bf16.msra.mxu0 %v2378
    %2710 = vmatprep.subr.bf16.mxu0 0
    %2711 = vmatpush1.bf16.msra.mxu0 %v2375
    %2712 = vmatprep.subr.bf16.mxu0 0
    %2713 = vmatpush1.bf16.msra.mxu0 %v2372
    %2714 = vmatprep.subr.bf16.mxu0 0
    %2715 = vmatpush1.bf16.msra.mxu0 %v2369
    %2716 = vmatprep.subr.bf16.mxu0 0
    %2717 = vmatpush1.bf16.msra.mxu0 %v2366
    %2718 = vmatprep.subr.bf16.mxu0 0
    %2719 = vmatpush2.bf16.msra.mxu0 %v2411
    %2720 = vmatprep.subr.bf16.mxu0 0
    %2721 = vmatpush2.bf16.msra.mxu0 %v2408
    %2722 = vmatprep.subr.bf16.mxu0 0
    %2723 = vmatpush2.bf16.msra.mxu0 %v2405
    %2724 = vmatprep.subr.bf16.mxu0 0
    %2725 = vmatpush2.bf16.msra.mxu0 %v2402
    %2726 = vmatprep.subr.bf16.mxu0 0
    %2727 = vmatpush2.bf16.msra.mxu0 %v2399
    %2728 = vmatprep.subr.bf16.mxu0 0
    %2729 = vmatpush2.bf16.msra.mxu0 %v2396
    %2730 = vmatprep.subr.bf16.mxu0 0
    %2731 = vmatpush2.bf16.msra.mxu0 %v2393
    %2732 = vmatprep.subr.bf16.mxu0 0
    %2733 = vmatpush2.bf16.msra.mxu0 %v2390
    %2734 = vmatprep.mubr.bf16.mxu0 %v2013
    %2735 = vmatmul.mubr.bf16.gmra.mxu0 %v2012
    %v2736 = vpop.f32.mrf.mxu0
    %v2737 = vadd.f32 %v1960, %v2736
    %v2738 = vpop.f32.mrf.mxu0
    %v2739 = vpop.f32.mrf.mxu0
    %v2740 = vadd.f32 %v1960, %v2739
    %v2741 = vpop.f32.mrf.mxu0
    %2742 = vmatprep.mubr.bf16.mxu0 %v2017
    %2743 = vmatmul.mubr.bf16.gmra.mxu0 %v2016
    %v2744 = vpop.f32.mrf.mxu0
    %v2745 = vadd.f32 %v1960, %v2744
    %v2746 = vpop.f32.mrf.mxu0
    %v2747 = vpop.f32.mrf.mxu0
    %v2748 = vadd.f32 %v1960, %v2747
    %v2749 = vpop.f32.mrf.mxu0
    %2750 = vmatprep.mubr.bf16.mxu0 %v2021
    %2751 = vmatmul.mubr.bf16.gmra.mxu0 %v2020
    %v2752 = vpop.f32.mrf.mxu0
    %v2753 = vadd.f32 %v1960, %v2752
    %v2754 = vpop.f32.mrf.mxu0
    %v2755 = vpop.f32.mrf.mxu0
    %v2756 = vadd.f32 %v1960, %v2755
    %v2757 = vpop.f32.mrf.mxu0
    %2758 = vmatprep.mubr.bf16.mxu0 %v2025
    %2759 = vmatmul.mubr.bf16.gmra.mxu0 %v2024
    %v2760 = vpop.f32.mrf.mxu0
    %v2761 = vadd.f32 %v1960, %v2760
    %v2762 = vpop.f32.mrf.mxu0
    %v2763 = vpop.f32.mrf.mxu0
    %v2764 = vadd.f32 %v1960, %v2763
    %v2765 = vpop.f32.mrf.mxu0
    %2766 = vdwg.mxu0
    %2767 = vmatprep.subr.bf16.mxu0 0
    %2768 = vmatpush1.bf16.msra.mxu0 %v2435
    %2769 = vmatprep.subr.bf16.mxu0 0
    %2770 = vmatpush1.bf16.msra.mxu0 %v2432
    %2771 = vmatprep.subr.bf16.mxu0 0
    %2772 = vmatpush1.bf16.msra.mxu0 %v2429
    %2773 = vmatprep.subr.bf16.mxu0 0
    %2774 = vmatpush1.bf16.msra.mxu0 %v2426
    %2775 = vmatprep.subr.bf16.mxu0 0
    %2776 = vmatpush1.bf16.msra.mxu0 %v2423
    %2777 = vmatprep.subr.bf16.mxu0 0
    %2778 = vmatpush1.bf16.msra.mxu0 %v2420
    %2779 = vmatprep.subr.bf16.mxu0 0
    %2780 = vmatpush1.bf16.msra.mxu0 %v2417
    %2781 = vmatprep.subr.bf16.mxu0 0
    %2782 = vmatpush1.bf16.msra.mxu0 %v2414
    %2783 = vmatprep.subr.bf16.mxu0 0
    %2784 = vmatpush2.bf16.msra.mxu0 %v2459
    %2785 = vmatprep.subr.bf16.mxu0 0
    %2786 = vmatpush2.bf16.msra.mxu0 %v2456
    %2787 = vmatprep.subr.bf16.mxu0 0
    %2788 = vmatpush2.bf16.msra.mxu0 %v2453
    %2789 = vmatprep.subr.bf16.mxu0 0
    %2790 = vmatpush2.bf16.msra.mxu0 %v2450
    %2791 = vmatprep.subr.bf16.mxu0 0
    %2792 = vmatpush2.bf16.msra.mxu0 %v2447
    %2793 = vmatprep.subr.bf16.mxu0 0
    %2794 = vmatpush2.bf16.msra.mxu0 %v2444
    %2795 = vmatprep.subr.bf16.mxu0 0
    %2796 = vmatpush2.bf16.msra.mxu0 %v2441
    %2797 = vmatprep.subr.bf16.mxu0 0
    %2798 = vmatpush2.bf16.msra.mxu0 %v2438
    %2799 = vmatprep.mubr.bf16.mxu0 %v2015
    %2800 = vmatmul.mubr.bf16.gmra.mxu0 %v2014
    %v2801 = vpop.f32.mrf.mxu0
    %v2802 = vadd.f32 %v2737, %v2801
    %v2803 = vpop.f32.mrf.mxu0
    %v2804 = vpop.f32.mrf.mxu0
    %v2805 = vadd.f32 %v2740, %v2804
    %v2806 = vpop.f32.mrf.mxu0
    %2807 = vmatprep.mubr.bf16.mxu0 %v2019
    %2808 = vmatmul.mubr.bf16.gmra.mxu0 %v2018
    %v2809 = vpop.f32.mrf.mxu0
    %v2810 = vadd.f32 %v2745, %v2809
    %v2811 = vpop.f32.mrf.mxu0
    %v2812 = vpop.f32.mrf.mxu0
    %v2813 = vadd.f32 %v2748, %v2812
    %v2814 = vpop.f32.mrf.mxu0
    %2815 = vmatprep.mubr.bf16.mxu0 %v2023
    %2816 = vmatmul.mubr.bf16.gmra.mxu0 %v2022
    %v2817 = vpop.f32.mrf.mxu0
    %v2818 = vadd.f32 %v2753, %v2817
    %v2819 = vpop.f32.mrf.mxu0
    %v2820 = vpop.f32.mrf.mxu0
    %v2821 = vadd.f32 %v2756, %v2820
    %v2822 = vpop.f32.mrf.mxu0
    %2823 = vmatprep.mubr.bf16.mxu0 %v2027
    %2824 = vmatmul.mubr.bf16.gmra.mxu0 %v2026
    %v2825 = vpop.f32.mrf.mxu0
    %v2826 = vadd.f32 %v2761, %v2825
    %v2827 = vpop.f32.mrf.mxu0
    %v2828 = vpop.f32.mrf.mxu0
    %v2829 = vadd.f32 %v2764, %v2828
    %v2830 = vpop.f32.mrf.mxu0
    %2831 = vdwg.mxu0
    %v2832 = vmax.f32 %v2664, 0.0
    %v2833 = vmax.f32 %v2666, 0.0
    %v2834 = vmax.f32 %v2802, 0.0
    %v2835 = vmax.f32 %v2668, 0.0
    %v2836 = vmax.f32 %v2670, 0.0
    %v2837 = vmax.f32 %v2805, 0.0
    %v2838 = vmax.f32 %v2674, 0.0
    %v2839 = vmax.f32 %v2676, 0.0
    %v2840 = vmax.f32 %v2810, 0.0
    %v2841 = vmax.f32 %v2678, 0.0
    %v2842 = vmax.f32 %v2680, 0.0
    %v2843 = vmax.f32 %v2813, 0.0
    %v2844 = vmax.f32 %v2684, 0.0
    %v2845 = vmax.f32 %v2686, 0.0
    %v2846 = vmax.f32 %v2818, 0.0
    %v2847 = vmax.f32 %v2688, 0.0
    %v2848 = vmax.f32 %v2690, 0.0
    %v2849 = vmax.f32 %v2821, 0.0
    %v2850 = vmax.f32 %v2694, 0.0
    %v2851 = vmax.f32 %v2696, 0.0
    %v2852 = vmax.f32 %v2826, 0.0
    %v2853 = vmax.f32 %v2698, 0.0
    %v2854 = vmax.f32 %v2700, 0.0
    %v2855 = vmax.f32 %v2829, 0.0
    %2856 = vst [vmem:[%s3] sm:$0xff] %v2832
    %2857 = vst [vmem:[%s3 + $0x8] sm:$0xff] %v2833
    %2858 = vst [vmem:[%s3 + $0x10] sm:$0xff] %v2834
    %2859 = vst [vmem:[%s3 + $0x18] sm:$0xff] %v2835
    %2860 = vst [vmem:[%s3 + $0x20] sm:$0xff] %v2836
    %2861 = vst [vmem:[%s3 + $0x28] sm:$0xff] %v2837
    %2862 = vst [vmem:[%s3 + $0x30] sm:$0xff] %v2838
    %2863 = vst [vmem:[%s3 + $0x38] sm:$0xff] %v2839
    %2864 = vst [vmem:[%s3 + $0x40] sm:$0xff] %v2840
    %2865 = vst [vmem:[%s3 + $0x48] sm:$0xff] %v2841
    %2866 = vst [vmem:[%s3 + $0x50] sm:$0xff] %v2842
    %2867 = vst [vmem:[%s3 + $0x58] sm:$0xff] %v2843
    %2868 = vst [vmem:[%s3 + $0x60] sm:$0xff] %v2844
    %2869 = vst [vmem:[%s3 + $0x68] sm:$0xff] %v2845
    %2870 = vst [vmem:[%s3 + $0x70] sm:$0xff] %v2846
    %2871 = vst [vmem:[%s3 + $0x78] sm:$0xff] %v2847
    %2872 = vst [vmem:[%s3 + $0x80] sm:$0xff] %v2848
    %2873 = vst [vmem:[%s3 + $0x88] sm:$0xff] %v2849
    %2874 = vst [vmem:[%s3 + $0x90] sm:$0xff] %v2850
    %2875 = vst [vmem:[%s3 + $0x98] sm:$0xff] %v2851
    %2876 = vst [vmem:[%s3 + $0xa0] sm:$0xff] %v2852
    %2877 = vst [vmem:[%s3 + $0xa8] sm:$0xff] %v2853
    %2878 = vst [vmem:[%s3 + $0xb0] sm:$0xff] %v2854
    %2879 = vst [vmem:[%s3 + $0xb8] sm:$0xff] %v2855
    // Predicated region
    $region22: #{conv_decoder_forward.1} parent=1 // pred_check
      _
    $region23: #{conv_decoder_forward.1} parent=1 // pred_check_branch
      %2881 = sbr.rel (0) target = $region25
    $region24: #{conv_decoder_forward.1} parent=1 // pred_region
      _
    $region25: #{conv_decoder_forward.1} parent=1 // pred_fallthru
      _
    // Predicated region
    $region26: #{conv_decoder_forward.1} parent=1 // pred_check
      _
    $region27: #{conv_decoder_forward.1} parent=1 // pred_check_branch
      %2883 = sbr.rel (0) target = $region29
    $region28: #{conv_decoder_forward.1} parent=1 // pred_region
      _
    $region29: #{conv_decoder_forward.1} parent=1 // pred_fallthru
      _
    %2884 = vsyncpa [#allocation7], 1
    %2885 = vsyncpa [#allocation9], 1

</llo_original>
